<compile_context>
chip_gen: v5e
topology: v5e:2x2
jax: 0.10.0
libtpu: 0.0.40
codegen_flags: <defaults>
</compile_context>

<pallas_src>
import math

import jax
import jax.numpy as jnp
from jax.experimental import pallas as pl
from jax.experimental.pallas import tpu as pltpu


_LAYER_DIMS = [(784, 400), (400, 200), (200, 100), (100, 10)]
_MATMUL_FLOPS_PER_ROW = sum(2 * fi * fo for fi, fo in _LAYER_DIMS)  # 2 * 414600
_MXU_ALIGN = 256  # multiple of the v6e/v7x (256) and v5e (128) MXU M dimension


def _round_up(x, m):
    return ((x + m - 1) // m) * m


# ---------------------------------------------------------------------------
# Kernel
# ---------------------------------------------------------------------------
def _linearnet_kernel(x_ref,
                      w1_ref, b1_ref,
                      w2_ref, b2_ref,
                      w3_ref, b3_ref,
                      w4_ref, b4_ref,
                      o_ref):
    """Forward pass for one batch tile.

    x_ref : (TB, 784) f32
    wN_ref: (in, out) bf16  (VMEM-resident across the whole grid)
    bN_ref: (1, out)  f32
    o_ref : (TB, 10)  f32  -- log_softmax over axis=1
    """
    x = x_ref[...]  # f32

    # fc1 + relu   (bf16 MXU inputs, f32 accumulation, f32 elementwise)
    h = jnp.dot(x.astype(jnp.bfloat16), w1_ref[...],
                preferred_element_type=jnp.float32) + b1_ref[...]
    h = jnp.maximum(h, 0.0)

    # fc2 + relu
    h = jnp.dot(h.astype(jnp.bfloat16), w2_ref[...],
                preferred_element_type=jnp.float32) + b2_ref[...]
    h = jnp.maximum(h, 0.0)

    # fc3 + relu
    h = jnp.dot(h.astype(jnp.bfloat16), w3_ref[...],
                preferred_element_type=jnp.float32) + b3_ref[...]
    h = jnp.maximum(h, 0.0)

    # fc4 (no relu)
    logits = jnp.dot(h.astype(jnp.bfloat16), w4_ref[...],
                     preferred_element_type=jnp.float32) + b4_ref[...]

    # numerically stable log_softmax along dim=1 (f32, row-wise -> ragged-tail safe)
    m = jnp.max(logits, axis=1, keepdims=True)
    shifted = logits - m
    lse = jnp.log(jnp.sum(jnp.exp(shifted), axis=1, keepdims=True))
    o_ref[...] = shifted - lse


# ---------------------------------------------------------------------------
# Wrapper
# ---------------------------------------------------------------------------
def _choose_tile(B, tb):
    """Rows per batch-grid step."""
    if B <= _MXU_ALIGN:
        # Small batch: single grid step (per-step pipeline overhead ~0.35us would
        # dominate a finer split, and on v7x each TC would re-load all the weights).
        # A block dim equal to the full array dim is always legal, so B < 8 is fine.
        return B if B < 8 else _round_up(B, 8)
    # Moderate/large batch:
    #  * tile <= ~B/2 so the grid has >= 2 steps -> both TCs get work on v7x,
    #  * 256-row alignment -> full MXU M passes on all generations,
    #  * capped at `tb` (default 1024 ~ 85-86% of the measured HBM roofline; the
    #    double-buffered x tile is only 2 x 3.2 MB, far under every VMEM size).
    tile = min(_round_up(tb, _MXU_ALIGN), _round_up(pl.cdiv(B, 2), _MXU_ALIGN))
    return max(_MXU_ALIGN, tile)


def linearnet_forward(x_nchw, params, tb=1024):
    """x_nchw: (B, 1, 28, 28) float32 -> (B, 10) log-probs (float32)."""
    B = x_nchw.shape[0]
    x = x_nchw.reshape(B, 784).astype(jnp.float32)  # same as torch x.view(-1, 784)

    TB = _choose_tile(B, tb)
    grid = (pl.cdiv(B, TB),)
    # Ragged tail (B % TB != 0) is handled by Pallas boundary-block clipping: the
    # final input block is only partially DMA'd and out-of-bounds output rows are
    # dropped on writeback.  No whole-tensor jnp.pad copy (which would add up to
    # +100% extra input HBM traffic in front of a bandwidth-bound kernel).

    (w1, b1), (w2, b2), (w3, b3), (w4, b4) = params

    def resident(arr):
        # Constant index_map -> DMA'd into VMEM exactly once, stays resident across
        # all batch-grid steps.
        return pl.BlockSpec(arr.shape, lambda i: (0, 0))

    # Advisory cost estimate (DMA-dominated: bf16 weights + f32 x/out).
    w_bytes = sum(fi * fo * 2 for fi, fo in _LAYER_DIMS)
    b_bytes = sum(fo * 4 for _, fo in _LAYER_DIMS)
    cost = pl.CostEstimate(
        flops=B * _MATMUL_FLOPS_PER_ROW,
        transcendentals=11 * B,  # exp over 10 logits + one log per row
        bytes_accessed=B * 784 * 4 + B * 10 * 4 + w_bytes + b_bytes,
    )

    return pl.pallas_call(
        _linearnet_kernel,
        out_shape=jax.ShapeDtypeStruct((B, 10), jnp.float32),
        grid_spec=pltpu.PrefetchScalarGridSpec(
            num_scalar_prefetch=0,
            grid=grid,
            in_specs=[
                pl.BlockSpec((TB, 784), lambda i: (i, 0)),   # pipelined x tile
                resident(w1), resident(b1),
                resident(w2), resident(b2),
                resident(w3), resident(b3),
                resident(w4), resident(b4),
            ],
            out_specs=pl.BlockSpec((TB, 10), lambda i: (i, 0)),
        ),
        compiler_params=pltpu.CompilerParams(
            # Batch tiles are independent -> shard grid steps across both TCs on v7x.
            dimension_semantics=("parallel",),
            # TB=1024 needs ~18 MiB scoped VMEM (x tiles + resident weights + f32
            # intermediates / bf16 cast copies): above v5e's 16 MiB default scoped
            # limit, comfortably below v7x's 64 MiB physical VMEM.
            vmem_limit_bytes=40 * 1024 * 1024,
        ),
        cost_estimate=cost,
    )(x, w1, b1, w2, b2, w3, b3, w4, b4)


# ---------------------------------------------------------------------------
# Params / reference
# ---------------------------------------------------------------------------
def init_params(key):
    """Deterministic init mimicking torch nn.Linear defaults:
    U(-1/sqrt(fan_in), 1/sqrt(fan_in)) for both weight and bias.
    Weights are stored as (in, out) = torch_weight.T, in bfloat16; biases in f32."""
    params = []
    for i, (fan_in, fan_out) in enumerate(_LAYER_DIMS):
        kw, kb = jax.random.split(jax.random.fold_in(key, i))
        bound = 1.0 / math.sqrt(fan_in)
        w = jax.random.uniform(kw, (fan_in, fan_out), jnp.float32, -bound, bound)
        b = jax.random.uniform(kb, (1, fan_out), jnp.float32, -bound, bound)
        params.append((w.astype(jnp.bfloat16), b))
    return params


def _reference_forward(x_nchw, params):
    """Plain-JAX reference mirroring the kernel numerics (bf16 dots, f32 accum)."""
    B = x_nchw.shape[0]
    h = x_nchw.reshape(B, 784).astype(jnp.float32)
    for i, (w, b) in enumerate(params):
        h = jnp.dot(h.astype(jnp.bfloat16), w,
                    preferred_element_type=jnp.float32) + b
        if i < len(params) - 1:
            h = jnp.maximum(h, 0.0)
    return jax.nn.log_softmax(h, axis=1)


# ---------------------------------------------------------------------------
# Main
# ---------------------------------------------------------------------------
if __name__ == "__main__":
    key = jax.random.PRNGKey(0)
    kx, kp, kx2 = jax.random.split(key, 3)

    params = init_params(kp)

    # Small batch, MNIST-shaped NCHW input like PyTorch (single-tile path).
    x = jax.random.normal(kx, (8, 1, 28, 28), jnp.float32)
    out = jax.block_until_ready(linearnet_forward(x, params))
    ref = _reference_forward(x, params)
    assert out.shape == (8, 10), out.shape
    assert jnp.allclose(out, ref, atol=2e-3, rtol=2e-3), "mismatch vs reference"
    assert jnp.allclose(jnp.sum(jnp.exp(out), axis=1), 1.0, atol=1e-3)

    # Moderate batch: exercises the multi-step "parallel" grid, the 256-aligned tile,
    # and the ragged last block (300 = 256 + 44) with no HBM pad copy.
    x2 = jax.random.normal(kx2, (300, 1, 28, 28), jnp.float32)
    out2 = jax.block_until_ready(linearnet_forward(x2, params))
    ref2 = _reference_forward(x2, params)
    assert out2.shape == (300, 10), out2.shape
    assert jnp.allclose(out2, ref2, atol=2e-3, rtol=2e-3), "mismatch vs reference (grid)"
    assert jnp.allclose(jnp.sum(jnp.exp(out2), axis=1), 1.0, atol=1e-3)

    print("KERNEL_OK")
</pallas_src>

<mosaic_0001>
module attributes {stable_mosaic.version = 11 : i64} {
  func.func @_linearnet_kernel(%arg0: i32, %arg1: memref<8x784xf32, #tpu.memory_space<vmem>>, %arg2: memref<784x400xbf16, #tpu.memory_space<vmem>>, %arg3: memref<1x400xf32, #tpu.memory_space<vmem>>, %arg4: memref<400x200xbf16, #tpu.memory_space<vmem>>, %arg5: memref<1x200xf32, #tpu.memory_space<vmem>>, %arg6: memref<200x100xbf16, #tpu.memory_space<vmem>>, %arg7: memref<1x100xf32, #tpu.memory_space<vmem>>, %arg8: memref<100x10xbf16, #tpu.memory_space<vmem>>, %arg9: memref<1x10xf32, #tpu.memory_space<vmem>>, %arg10: memref<8x10xf32, #tpu.memory_space<vmem>>) attributes {dimension_semantics = [#tpu.dimension_semantics<parallel>], iteration_bounds = array<i64: 1>, scalar_prefetch = 0 : i64, scratch_operands = 0 : i64, tpu.core_type = #tpu.core_type<tc>, window_params = [{transform_indices = @transform_0, window_bounds = array<i64: 8, 784>}, {pipeline_mode = #tpu.pipeline_mode<synchronous>, transform_indices = @transform_1, window_bounds = array<i64: 784, 400>}, {pipeline_mode = #tpu.pipeline_mode<synchronous>, transform_indices = @transform_2, window_bounds = array<i64: 1, 400>}, {pipeline_mode = #tpu.pipeline_mode<synchronous>, transform_indices = @transform_3, window_bounds = array<i64: 400, 200>}, {pipeline_mode = #tpu.pipeline_mode<synchronous>, transform_indices = @transform_4, window_bounds = array<i64: 1, 200>}, {pipeline_mode = #tpu.pipeline_mode<synchronous>, transform_indices = @transform_5, window_bounds = array<i64: 200, 100>}, {pipeline_mode = #tpu.pipeline_mode<synchronous>, transform_indices = @transform_6, window_bounds = array<i64: 1, 100>}, {pipeline_mode = #tpu.pipeline_mode<synchronous>, transform_indices = @transform_7, window_bounds = array<i64: 100, 10>}, {pipeline_mode = #tpu.pipeline_mode<synchronous>, transform_indices = @transform_8, window_bounds = array<i64: 1, 10>}, {transform_indices = @transform_9, window_bounds = array<i64: 8, 10>}]} {
    %c0 = arith.constant 0 : index
    %c0_0 = arith.constant 0 : index
    %0 = vector.load %arg1[%c0, %c0_0] : memref<8x784xf32, #tpu.memory_space<vmem>>, vector<8x784xf32>
    %1 = arith.truncf %0 : vector<8x784xf32> to vector<8x784xbf16>
    %c0_1 = arith.constant 0 : index
    %c0_2 = arith.constant 0 : index
    %2 = vector.load %arg2[%c0_1, %c0_2] : memref<784x400xbf16, #tpu.memory_space<vmem>>, vector<784x400xbf16>
    %cst = arith.constant dense<0.000000e+00> : vector<8x400xf32>
    %3 = tpu.matmul %1, %2, %cst {dimension_numbers = #tpu.dot_dimension_numbers<[1], [0], [0], [1], [0, 0, 1, 1], [], []>} : vector<8x784xbf16>, vector<784x400xbf16>, vector<8x400xf32> -> vector<8x400xf32>
    %c0_3 = arith.constant 0 : index
    %c0_4 = arith.constant 0 : index
    %4 = vector.load %arg3[%c0_3, %c0_4] : memref<1x400xf32, #tpu.memory_space<vmem>>, vector<1x400xf32>
    %5 = vector.broadcast %4 : vector<1x400xf32> to vector<8x400xf32>
    %6 = arith.addf %3, %5 : vector<8x400xf32>
    %cst_5 = arith.constant 0.000000e+00 : f32
    %7 = vector.broadcast %cst_5 : f32 to vector<8x400xf32>
    %8 = arith.maximumf %6, %7 : vector<8x400xf32>
    %9 = arith.truncf %8 : vector<8x400xf32> to vector<8x400xbf16>
    %c0_6 = arith.constant 0 : index
    %c0_7 = arith.constant 0 : index
    %10 = vector.load %arg4[%c0_6, %c0_7] : memref<400x200xbf16, #tpu.memory_space<vmem>>, vector<400x200xbf16>
    %cst_8 = arith.constant dense<0.000000e+00> : vector<8x200xf32>
    %11 = tpu.matmul %9, %10, %cst_8 {dimension_numbers = #tpu.dot_dimension_numbers<[1], [0], [0], [1], [0, 0, 1, 1], [], []>} : vector<8x400xbf16>, vector<400x200xbf16>, vector<8x200xf32> -> vector<8x200xf32>
    %c0_9 = arith.constant 0 : index
    %c0_10 = arith.constant 0 : index
    %12 = vector.load %arg5[%c0_9, %c0_10] : memref<1x200xf32, #tpu.memory_space<vmem>>, vector<1x200xf32>
    %13 = vector.broadcast %12 : vector<1x200xf32> to vector<8x200xf32>
    %14 = arith.addf %11, %13 : vector<8x200xf32>
    %cst_11 = arith.constant 0.000000e+00 : f32
    %15 = vector.broadcast %cst_11 : f32 to vector<8x200xf32>
    %16 = arith.maximumf %14, %15 : vector<8x200xf32>
    %17 = arith.truncf %16 : vector<8x200xf32> to vector<8x200xbf16>
    %c0_12 = arith.constant 0 : index
    %c0_13 = arith.constant 0 : index
    %18 = vector.load %arg6[%c0_12, %c0_13] : memref<200x100xbf16, #tpu.memory_space<vmem>>, vector<200x100xbf16>
    %cst_14 = arith.constant dense<0.000000e+00> : vector<8x100xf32>
    %19 = tpu.matmul %17, %18, %cst_14 {dimension_numbers = #tpu.dot_dimension_numbers<[1], [0], [0], [1], [0, 0, 1, 1], [], []>} : vector<8x200xbf16>, vector<200x100xbf16>, vector<8x100xf32> -> vector<8x100xf32>
    %c0_15 = arith.constant 0 : index
    %c0_16 = arith.constant 0 : index
    %20 = vector.load %arg7[%c0_15, %c0_16] : memref<1x100xf32, #tpu.memory_space<vmem>>, vector<1x100xf32>
    %21 = vector.broadcast %20 : vector<1x100xf32> to vector<8x100xf32>
    %22 = arith.addf %19, %21 : vector<8x100xf32>
    %cst_17 = arith.constant 0.000000e+00 : f32
    %23 = vector.broadcast %cst_17 : f32 to vector<8x100xf32>
    %24 = arith.maximumf %22, %23 : vector<8x100xf32>
    %25 = arith.truncf %24 : vector<8x100xf32> to vector<8x100xbf16>
    %c0_18 = arith.constant 0 : index
    %c0_19 = arith.constant 0 : index
    %26 = vector.load %arg8[%c0_18, %c0_19] : memref<100x10xbf16, #tpu.memory_space<vmem>>, vector<100x10xbf16>
    %cst_20 = arith.constant dense<0.000000e+00> : vector<8x10xf32>
    %27 = tpu.matmul %25, %26, %cst_20 {dimension_numbers = #tpu.dot_dimension_numbers<[1], [0], [0], [1], [0, 0, 1, 1], [], []>} : vector<8x100xbf16>, vector<100x10xbf16>, vector<8x10xf32> -> vector<8x10xf32>
    %c0_21 = arith.constant 0 : index
    %c0_22 = arith.constant 0 : index
    %28 = vector.load %arg9[%c0_21, %c0_22] : memref<1x10xf32, #tpu.memory_space<vmem>>, vector<1x10xf32>
    %29 = vector.broadcast %28 : vector<1x10xf32> to vector<8x10xf32>
    %30 = arith.addf %27, %29 : vector<8x10xf32>
    %cst_23 = arith.constant dense<0xFF800000> : vector<8xf32>
    %31 = vector.multi_reduction <maximumf>, %30, %cst_23 [1] : vector<8x10xf32> to vector<8xf32>
    %32 = vector.shape_cast %31 : vector<8xf32> to vector<8x1xf32>
    %33 = vector.broadcast %32 : vector<8x1xf32> to vector<8x10xf32>
    %34 = arith.subf %30, %33 : vector<8x10xf32>
    %35 = math.exp %34 : vector<8x10xf32>
    %cst_24 = arith.constant dense<0.000000e+00> : vector<8xf32>
    %36 = vector.multi_reduction <add>, %35, %cst_24 [1] : vector<8x10xf32> to vector<8xf32>
    %37 = vector.shape_cast %36 : vector<8xf32> to vector<8x1xf32>
    %38 = math.log %37 : vector<8x1xf32>
    %39 = vector.broadcast %38 : vector<8x1xf32> to vector<8x10xf32>
    %40 = arith.subf %34, %39 : vector<8x10xf32>
    %c0_25 = arith.constant 0 : index
    %c0_26 = arith.constant 0 : index
    %41 = vector.load %arg10[%c0_25, %c0_26] : memref<8x10xf32, #tpu.memory_space<vmem>>, vector<8x10xf32>
    tpu.vector_store %arg10[%c0_25, %c0_26], %40 {strides = array<i32>} : memref<8x10xf32, #tpu.memory_space<vmem>>, vector<8x10xf32>,
    return
  }
  func.func @transform_0(%arg0: i32) -> (i32, i32) {
    %c0_i32 = arith.constant 0 : i32
    %c0_i32_0 = arith.constant 0 : i32
    return %arg0, %c0_i32 : i32, i32
  }
  func.func @transform_1(%arg0: i32) -> (i32, i32) {
    %c0_i32 = arith.constant 0 : i32
    %c0_i32_0 = arith.constant 0 : i32
    %c0_i32_1 = arith.constant 0 : i32
    return %c0_i32, %c0_i32_0 : i32, i32
  }
  func.func @transform_2(%arg0: i32) -> (i32, i32) {
    %c0_i32 = arith.constant 0 : i32
    %c0_i32_0 = arith.constant 0 : i32
    %c0_i32_1 = arith.constant 0 : i32
    return %c0_i32, %c0_i32_0 : i32, i32
  }
  func.func @transform_3(%arg0: i32) -> (i32, i32) {
    %c0_i32 = arith.constant 0 : i32
    %c0_i32_0 = arith.constant 0 : i32
    %c0_i32_1 = arith.constant 0 : i32
    return %c0_i32, %c0_i32_0 : i32, i32
  }
  func.func @transform_4(%arg0: i32) -> (i32, i32) {
    %c0_i32 = arith.constant 0 : i32
    %c0_i32_0 = arith.constant 0 : i32
    %c0_i32_1 = arith.constant 0 : i32
    return %c0_i32, %c0_i32_0 : i32, i32
  }
  func.func @transform_5(%arg0: i32) -> (i32, i32) {
    %c0_i32 = arith.constant 0 : i32
    %c0_i32_0 = arith.constant 0 : i32
    %c0_i32_1 = arith.constant 0 : i32
    return %c0_i32, %c0_i32_0 : i32, i32
  }
  func.func @transform_6(%arg0: i32) -> (i32, i32) {
    %c0_i32 = arith.constant 0 : i32
    %c0_i32_0 = arith.constant 0 : i32
    %c0_i32_1 = arith.constant 0 : i32
    return %c0_i32, %c0_i32_0 : i32, i32
  }
  func.func @transform_7(%arg0: i32) -> (i32, i32) {
    %c0_i32 = arith.constant 0 : i32
    %c0_i32_0 = arith.constant 0 : i32
    %c0_i32_1 = arith.constant 0 : i32
    return %c0_i32, %c0_i32_0 : i32, i32
  }
  func.func @transform_8(%arg0: i32) -> (i32, i32) {
    %c0_i32 = arith.constant 0 : i32
    %c0_i32_0 = arith.constant 0 : i32
    %c0_i32_1 = arith.constant 0 : i32
    return %c0_i32, %c0_i32_0 : i32, i32
  }
  func.func @transform_9(%arg0: i32) -> (i32, i32) {
    %c0_i32 = arith.constant 0 : i32
    %c0_i32_0 = arith.constant 0 : i32
    return %arg0, %c0_i32 : i32, i32
  }
}

</mosaic_0001>

<llo_original>
// kernel: tpu_custom_call.1
$region0: #{tpu_custom_call.1}
  #allocation0 [shape = 'u32[]', space=smem, size = 0x4, offset = 0x4, fixed_abs, tag = 'smem constant byte address 0x4 - core index']
  #allocation1 [shape = 'u32[72,128]{1,0:T(1,128)}', space=vmem, size = 0x9000, scoped, tag = 'internal scratch']
  %s0 = inlined_call_operand.vmem [shape: f32[8,784], index: 0, kind: input, shape index: {}]
  %s1 = inlined_call_operand.vmem [shape: bf16[784,400], index: 1, kind: input, shape index: {}]
  %s2 = inlined_call_operand.vmem [shape: f32[1,400], index: 2, kind: input, shape index: {}]
  %s3 = inlined_call_operand.vmem [shape: bf16[400,200], index: 3, kind: input, shape index: {}]
  %s4 = inlined_call_operand.vmem [shape: f32[1,200], index: 4, kind: input, shape index: {}]
  %s5 = inlined_call_operand.vmem [shape: bf16[200,100], index: 5, kind: input, shape index: {}]
  %s6 = inlined_call_operand.vmem [shape: f32[1,100], index: 6, kind: input, shape index: {}]
  %s7 = inlined_call_operand.vmem [shape: bf16[100,10], index: 7, kind: input, shape index: {}]
  %s8 = inlined_call_operand.vmem [shape: f32[1,10], index: 8, kind: input, shape index: {}]
  %s9 = inlined_call_operand.hbm [shape: f32[8,10], index: 9, kind: output, shape index: {}]
  %s10 = sld [smem:[#allocation0]]
  $region46: #{tpu_custom_call.1} parent=0
    _
  %s12 = ssub.s32 1, %s10
  %s13 = scalar_select 0, %s12, %s10
  $region1: #{tpu_custom_call.1} parent=0
    #allocation2 [shape = 'u8[4096]{0}', space=vmem, size = 0x1000, scoped, tag = 'output window, operand 0, single buffered']
    #allocation3 [shape = 's32[1]{0}', space=sflag, size = 0x4, scoped, tag = 'scoped memory for tpu_custom_call.1']
    %14 = vsyncpa [#allocation3], 0
    // Predicated region
    $region2: #{tpu_custom_call.1} parent=1 // pred_check
      _
    $region3: #{tpu_custom_call.1} parent=1 // pred_check_branch
      %16 = sbr.rel (0) target = $region5
    $region4: #{tpu_custom_call.1} parent=1 // pred_region
      _
    $region5: #{tpu_custom_call.1} parent=1 // pred_fallthru
      _
    // Predicated region
    $region6: #{tpu_custom_call.1} parent=1 // pred_check
      _
    $region7: #{tpu_custom_call.1} parent=1 // pred_check_branch
      %18 = sbr.rel (0) target = $region9
    $region8: #{tpu_custom_call.1} parent=1 // pred_region
      _
    $region9: #{tpu_custom_call.1} parent=1 // pred_fallthru
      _
    // Predicated region
    $region10: #{tpu_custom_call.1} parent=1 // pred_check
      _
    $region11: #{tpu_custom_call.1} parent=1 // pred_check_branch
      %20 = sbr.rel (0) target = $region13
    $region12: #{tpu_custom_call.1} parent=1 // pred_region
      _
    $region13: #{tpu_custom_call.1} parent=1 // pred_fallthru
      _
    // Predicated region
    $region14: #{tpu_custom_call.1} parent=1 // pred_check
      _
    $region15: #{tpu_custom_call.1} parent=1 // pred_check_branch
      %22 = sbr.rel (0) target = $region17
    $region16: #{tpu_custom_call.1} parent=1 // pred_region
      _
    $region17: #{tpu_custom_call.1} parent=1 // pred_fallthru
      _
    // Predicated region
    $region18: #{tpu_custom_call.1} parent=1 // pred_check
      _
    $region19: #{tpu_custom_call.1} parent=1 // pred_check_branch
      %24 = sbr.rel (0) target = $region21
    $region20: #{tpu_custom_call.1} parent=1 // pred_region
      _
    $region21: #{tpu_custom_call.1} parent=1 // pred_fallthru
      _
    // Predicated region
    $region22: #{tpu_custom_call.1} parent=1 // pred_check
      _
    $region23: #{tpu_custom_call.1} parent=1 // pred_check_branch
      %26 = sbr.rel (0) target = $region25
    $region24: #{tpu_custom_call.1} parent=1 // pred_region
      _
    $region25: #{tpu_custom_call.1} parent=1 // pred_fallthru
      _
    // Predicated region
    $region26: #{tpu_custom_call.1} parent=1 // pred_check
      _
    $region27: #{tpu_custom_call.1} parent=1 // pred_check_branch
      %28 = sbr.rel (0) target = $region29
    $region28: #{tpu_custom_call.1} parent=1 // pred_region
      _
    $region29: #{tpu_custom_call.1} parent=1 // pred_fallthru
      _
    // Predicated region
    $region30: #{tpu_custom_call.1} parent=1 // pred_check
      _
    $region31: #{tpu_custom_call.1} parent=1 // pred_check_branch
      %30 = sbr.rel (0) target = $region33
    $region32: #{tpu_custom_call.1} parent=1 // pred_region
      _
    $region33: #{tpu_custom_call.1} parent=1 // pred_fallthru
      _
    // Predicated region
    $region34: #{tpu_custom_call.1} parent=1 // pred_check
      _
    $region35: #{tpu_custom_call.1} parent=1 // pred_check_branch
      %32 = sbr.rel (0) target = $region37
    $region36: #{tpu_custom_call.1} parent=1 // pred_region
      _
    $region37: #{tpu_custom_call.1} parent=1 // pred_fallthru
      _
    %v34 = vld [vmem:[%s0] sm:$0xff]
    %v35 = vld [vmem:[%s0 + $0x8] sm:$0xff]
    %v36 = vld [vmem:[%s0 + $0x10] sm:$0xff]
    %v37 = vld [vmem:[%s0 + $0x18] sm:$0xff]
    %v38 = vld [vmem:[%s0 + $0x20] sm:$0xff]
    %v39 = vld [vmem:[%s0 + $0x28] sm:$0xff]
    %v40 = vld [vmem:[%s0 + $0x30] sm:$0xff]
    %v41 = vpack.c.bf16 %v34, %v34
    %v42 = vpack.c.bf16 %v35, %v35
    %v43 = vpack.c.bf16 %v36, %v36
    %v44 = vpack.c.bf16 %v37, %v37
    %v45 = vpack.c.bf16 %v38, %v38
    %v46 = vpack.c.bf16 %v39, %v39
    %v47 = vpack.c.bf16 %v40, %v40
    %v48 = vld [vmem:[%s1] sm:$0xff]
    %v49 = vld [vmem:[%s1 + $0x8] sm:$0xff]
    %v50 = vld [vmem:[%s1 + $0x10] sm:$0xff]
    %v51 = vld [vmem:[%s1 + $0x18] sm:$0xff]
    %v52 = vld [vmem:[%s1 + $0x20] sm:$0xff]
    %v53 = vld [vmem:[%s1 + $0x28] sm:$0xff]
    %v54 = vld [vmem:[%s1 + $0x30] sm:$0xff]
    %v55 = vld [vmem:[%s1 + $0x38] sm:$0xff]
    %v56 = vld [vmem:[%s1 + $0x40] sm:$0xff]
    %v57 = vld [vmem:[%s1 + $0x48] sm:$0xff]
    %v58 = vld [vmem:[%s1 + $0x50] sm:$0xff]
    %v59 = vld [vmem:[%s1 + $0x58] sm:$0xff]
    %v60 = vld [vmem:[%s1 + $0x60] sm:$0xff]
    %v61 = vld [vmem:[%s1 + $0x68] sm:$0xff]
    %v62 = vld [vmem:[%s1 + $0x70] sm:$0xff]
    %v63 = vld [vmem:[%s1 + $0x78] sm:$0xff]
    %v64 = vld [vmem:[%s1 + $0x80] sm:$0xff]
    %v65 = vld [vmem:[%s1 + $0x88] sm:$0xff]
    %v66 = vld [vmem:[%s1 + $0x90] sm:$0xff]
    %v67 = vld [vmem:[%s1 + $0x98] sm:$0xff]
    %v68 = vld [vmem:[%s1 + $0xa0] sm:$0xff]
    %v69 = vld [vmem:[%s1 + $0xa8] sm:$0xff]
    %v70 = vld [vmem:[%s1 + $0xb0] sm:$0xff]
    %v71 = vld [vmem:[%s1 + $0xb8] sm:$0xff]
    %v72 = vld [vmem:[%s1 + $0xc0] sm:$0xff]
    %v73 = vld [vmem:[%s1 + $0xc8] sm:$0xff]
    %v74 = vld [vmem:[%s1 + $0xd0] sm:$0xff]
    %v75 = vld [vmem:[%s1 + $0xd8] sm:$0xff]
    %v76 = vld [vmem:[%s1 + $0xe0] sm:$0xff]
    %v77 = vld [vmem:[%s1 + $0xe8] sm:$0xff]
    %v78 = vld [vmem:[%s1 + $0xf0] sm:$0xff]
    %v79 = vld [vmem:[%s1 + $0xf8] sm:$0xff]
    %v80 = vld [vmem:[%s1 + $0x100] sm:$0xff]
    %v81 = vld [vmem:[%s1 + $0x108] sm:$0xff]
    %v82 = vld [vmem:[%s1 + $0x110] sm:$0xff]
    %v83 = vld [vmem:[%s1 + $0x118] sm:$0xff]
    %v84 = vld [vmem:[%s1 + $0x120] sm:$0xff]
    %v85 = vld [vmem:[%s1 + $0x128] sm:$0xff]
    %v86 = vld [vmem:[%s1 + $0x130] sm:$0xff]
    %v87 = vld [vmem:[%s1 + $0x138] sm:$0xff]
    %v88 = vld [vmem:[%s1 + $0x140] sm:$0xff]
    %v89 = vld [vmem:[%s1 + $0x148] sm:$0xff]
    %v90 = vld [vmem:[%s1 + $0x150] sm:$0xff]
    %v91 = vld [vmem:[%s1 + $0x158] sm:$0xff]
    %v92 = vld [vmem:[%s1 + $0x160] sm:$0xff]
    %v93 = vld [vmem:[%s1 + $0x168] sm:$0xff]
    %v94 = vld [vmem:[%s1 + $0x170] sm:$0xff]
    %v95 = vld [vmem:[%s1 + $0x178] sm:$0xff]
    %v96 = vld [vmem:[%s1 + $0x180] sm:$0xff]
    %v97 = vld [vmem:[%s1 + $0x188] sm:$0xff]
    %v98 = vld [vmem:[%s1 + $0x190] sm:$0xff]
    %v99 = vld [vmem:[%s1 + $0x198] sm:$0xff]
    %v100 = vld [vmem:[%s1 + $0x1a0] sm:$0xff]
    %v101 = vld [vmem:[%s1 + $0x1a8] sm:$0xff]
    %v102 = vld [vmem:[%s1 + $0x1b0] sm:$0xff]
    %v103 = vld [vmem:[%s1 + $0x1b8] sm:$0xff]
    %v104 = vld [vmem:[%s1 + $0x1c0] sm:$0xff]
    %v105 = vld [vmem:[%s1 + $0x1c8] sm:$0xff]
    %v106 = vld [vmem:[%s1 + $0x1d0] sm:$0xff]
    %v107 = vld [vmem:[%s1 + $0x1d8] sm:$0xff]
    %v108 = vld [vmem:[%s1 + $0x1e0] sm:$0xff]
    %v109 = vld [vmem:[%s1 + $0x1e8] sm:$0xff]
    %v110 = vld [vmem:[%s1 + $0x1f0] sm:$0xff]
    %v111 = vld [vmem:[%s1 + $0x1f8] sm:$0xff]
    %v112 = vld [vmem:[%s1 + $0x200] sm:$0xff]
    %v113 = vld [vmem:[%s1 + $0x208] sm:$0xff]
    %v114 = vld [vmem:[%s1 + $0x210] sm:$0xff]
    %v115 = vld [vmem:[%s1 + $0x218] sm:$0xff]
    %v116 = vld [vmem:[%s1 + $0x220] sm:$0xff]
    %v117 = vld [vmem:[%s1 + $0x228] sm:$0xff]
    %v118 = vld [vmem:[%s1 + $0x230] sm:$0xff]
    %v119 = vld [vmem:[%s1 + $0x238] sm:$0xff]
    %v120 = vld [vmem:[%s1 + $0x240] sm:$0xff]
    %v121 = vld [vmem:[%s1 + $0x248] sm:$0xff]
    %v122 = vld [vmem:[%s1 + $0x250] sm:$0xff]
    %v123 = vld [vmem:[%s1 + $0x258] sm:$0xff]
    %v124 = vld [vmem:[%s1 + $0x260] sm:$0xff]
    %v125 = vld [vmem:[%s1 + $0x268] sm:$0xff]
    %v126 = vld [vmem:[%s1 + $0x270] sm:$0xff]
    %v127 = vld [vmem:[%s1 + $0x278] sm:$0xff]
    %v128 = vld [vmem:[%s1 + $0x280] sm:$0xff]
    %v129 = vld [vmem:[%s1 + $0x288] sm:$0xff]
    %v130 = vld [vmem:[%s1 + $0x290] sm:$0xff]
    %v131 = vld [vmem:[%s1 + $0x298] sm:$0xff]
    %v132 = vld [vmem:[%s1 + $0x2a0] sm:$0xff]
    %v133 = vld [vmem:[%s1 + $0x2a8] sm:$0xff]
    %v134 = vld [vmem:[%s1 + $0x2b0] sm:$0xff]
    %v135 = vld [vmem:[%s1 + $0x2b8] sm:$0xff]
    %v136 = vld [vmem:[%s1 + $0x2c0] sm:$0xff]
    %v137 = vld [vmem:[%s1 + $0x2c8] sm:$0xff]
    %v138 = vld [vmem:[%s1 + $0x2d0] sm:$0xff]
    %v139 = vld [vmem:[%s1 + $0x2d8] sm:$0xff]
    %v140 = vld [vmem:[%s1 + $0x2e0] sm:$0xff]
    %v141 = vld [vmem:[%s1 + $0x2e8] sm:$0xff]
    %v142 = vld [vmem:[%s1 + $0x2f0] sm:$0xff]
    %v143 = vld [vmem:[%s1 + $0x2f8] sm:$0xff]
    %v144 = vld [vmem:[%s1 + $0x300] sm:$0xff]
    %v145 = vld [vmem:[%s1 + $0x308] sm:$0xff]
    %v146 = vld [vmem:[%s1 + $0x310] sm:$0xff]
    %v147 = vld [vmem:[%s1 + $0x318] sm:$0xff]
    %v148 = vld [vmem:[%s1 + $0x320] sm:$0xff]
    %v149 = vld [vmem:[%s1 + $0x328] sm:$0xff]
    %v150 = vld [vmem:[%s1 + $0x330] sm:$0xff]
    %v151 = vld [vmem:[%s1 + $0x338] sm:$0xff]
    %v152 = vld [vmem:[%s1 + $0x340] sm:$0xff]
    %v153 = vld [vmem:[%s1 + $0x348] sm:$0xff]
    %v154 = vld [vmem:[%s1 + $0x350] sm:$0xff]
    %v155 = vld [vmem:[%s1 + $0x358] sm:$0xff]
    %v156 = vld [vmem:[%s1 + $0x360] sm:$0xff]
    %v157 = vld [vmem:[%s1 + $0x368] sm:$0xff]
    %v158 = vld [vmem:[%s1 + $0x370] sm:$0xff]
    %v159 = vld [vmem:[%s1 + $0x378] sm:$0xff]
    %v160 = vld [vmem:[%s1 + $0x380] sm:$0xff]
    %v161 = vld [vmem:[%s1 + $0x388] sm:$0xff]
    %v162 = vld [vmem:[%s1 + $0x390] sm:$0xff]
    %v163 = vld [vmem:[%s1 + $0x398] sm:$0xff]
    %v164 = vld [vmem:[%s1 + $0x3a0] sm:$0xff]
    %v165 = vld [vmem:[%s1 + $0x3a8] sm:$0xff]
    %v166 = vld [vmem:[%s1 + $0x3b0] sm:$0xff]
    %v167 = vld [vmem:[%s1 + $0x3b8] sm:$0xff]
    %v168 = vld [vmem:[%s1 + $0x3c0] sm:$0xff]
    %v169 = vld [vmem:[%s1 + $0x3c8] sm:$0xff]
    %v170 = vld [vmem:[%s1 + $0x3d0] sm:$0xff]
    %v171 = vld [vmem:[%s1 + $0x3d8] sm:$0xff]
    %v172 = vld [vmem:[%s1 + $0x3e0] sm:$0xff]
    %v173 = vld [vmem:[%s1 + $0x3e8] sm:$0xff]
    %v174 = vld [vmem:[%s1 + $0x3f0] sm:$0xff]
    %v175 = vld [vmem:[%s1 + $0x3f8] sm:$0xff]
    %v176 = vld [vmem:[%s1 + $0x400] sm:$0xff]
    %v177 = vld [vmem:[%s1 + $0x408] sm:$0xff]
    %v178 = vld [vmem:[%s1 + $0x410] sm:$0xff]
    %v179 = vld [vmem:[%s1 + $0x418] sm:$0xff]
    %v180 = vld [vmem:[%s1 + $0x420] sm:$0xff]
    %v181 = vld [vmem:[%s1 + $0x428] sm:$0xff]
    %v182 = vld [vmem:[%s1 + $0x430] sm:$0xff]
    %v183 = vld [vmem:[%s1 + $0x438] sm:$0xff]
    %v184 = vld [vmem:[%s1 + $0x440] sm:$0xff]
    %v185 = vld [vmem:[%s1 + $0x448] sm:$0xff]
    %v186 = vld [vmem:[%s1 + $0x450] sm:$0xff]
    %v187 = vld [vmem:[%s1 + $0x458] sm:$0xff]
    %v188 = vld [vmem:[%s1 + $0x460] sm:$0xff]
    %v189 = vld [vmem:[%s1 + $0x468] sm:$0xff]
    %v190 = vld [vmem:[%s1 + $0x470] sm:$0xff]
    %v191 = vld [vmem:[%s1 + $0x478] sm:$0xff]
    %v192 = vld [vmem:[%s1 + $0x480] sm:$0xff]
    %v193 = vld [vmem:[%s1 + $0x488] sm:$0xff]
    %v194 = vld [vmem:[%s1 + $0x490] sm:$0xff]
    %v195 = vld [vmem:[%s1 + $0x498] sm:$0xff]
    %v196 = vld [vmem:[%s1 + $0x4a0] sm:$0xff]
    %v197 = vld [vmem:[%s1 + $0x4a8] sm:$0xff]
    %v198 = vld [vmem:[%s1 + $0x4b0] sm:$0xff]
    %v199 = vld [vmem:[%s1 + $0x4b8] sm:$0xff]
    %v200 = vld [vmem:[%s1 + $0x4c0] sm:$0xff]
    %v201 = vld [vmem:[%s1 + $0x4c8] sm:$0xff]
    %v202 = vld [vmem:[%s1 + $0x4d0] sm:$0xff]
    %v203 = vld [vmem:[%s1 + $0x4d8] sm:$0xff]
    %v204 = vld [vmem:[%s1 + $0x4e0] sm:$0xff]
    %v205 = vld [vmem:[%s1 + $0x4e8] sm:$0xff]
    %v206 = vld [vmem:[%s1 + $0x4f0] sm:$0xff]
    %v207 = vld [vmem:[%s1 + $0x4f8] sm:$0xff]
    %v208 = vld [vmem:[%s1 + $0x500] sm:$0xff]
    %v209 = vld [vmem:[%s1 + $0x508] sm:$0xff]
    %v210 = vld [vmem:[%s1 + $0x510] sm:$0xff]
    %v211 = vld [vmem:[%s1 + $0x518] sm:$0xff]
    %v212 = vld [vmem:[%s1 + $0x520] sm:$0xff]
    %v213 = vld [vmem:[%s1 + $0x528] sm:$0xff]
    %v214 = vld [vmem:[%s1 + $0x530] sm:$0xff]
    %v215 = vld [vmem:[%s1 + $0x538] sm:$0xff]
    %v216 = vld [vmem:[%s1 + $0x540] sm:$0xff]
    %v217 = vld [vmem:[%s1 + $0x548] sm:$0xff]
    %v218 = vld [vmem:[%s1 + $0x550] sm:$0xff]
    %v219 = vld [vmem:[%s1 + $0x558] sm:$0xff]
    %v220 = vld [vmem:[%s1 + $0x560] sm:$0xff]
    %v221 = vld [vmem:[%s1 + $0x568] sm:$0xff]
    %v222 = vld [vmem:[%s1 + $0x570] sm:$0xff]
    %v223 = vld [vmem:[%s1 + $0x578] sm:$0xff]
    %v224 = vld [vmem:[%s1 + $0x580] sm:$0xff]
    %v225 = vld [vmem:[%s1 + $0x588] sm:$0xff]
    %v226 = vld [vmem:[%s1 + $0x590] sm:$0xff]
    %v227 = vld [vmem:[%s1 + $0x598] sm:$0xff]
    %v228 = vld [vmem:[%s1 + $0x5a0] sm:$0xff]
    %v229 = vld [vmem:[%s1 + $0x5a8] sm:$0xff]
    %v230 = vld [vmem:[%s1 + $0x5b0] sm:$0xff]
    %v231 = vld [vmem:[%s1 + $0x5b8] sm:$0xff]
    %v232 = vld [vmem:[%s1 + $0x5c0] sm:$0xff]
    %v233 = vld [vmem:[%s1 + $0x5c8] sm:$0xff]
    %v234 = vld [vmem:[%s1 + $0x5d0] sm:$0xff]
    %v235 = vld [vmem:[%s1 + $0x5d8] sm:$0xff]
    %v236 = vld [vmem:[%s1 + $0x5e0] sm:$0xff]
    %v237 = vld [vmem:[%s1 + $0x5e8] sm:$0xff]
    %v238 = vld [vmem:[%s1 + $0x5f0] sm:$0xff]
    %v239 = vld [vmem:[%s1 + $0x5f8] sm:$0xff]
    %v240 = vld [vmem:[%s1 + $0x600] sm:$0xff]
    %v241 = vld [vmem:[%s1 + $0x608] sm:$0xff]
    %v242 = vld [vmem:[%s1 + $0x610] sm:$0xff]
    %v243 = vld [vmem:[%s1 + $0x618] sm:$0xff]
    %v244 = vld [vmem:[%s2] sm:$0xf]
    %v246 = vperm.slane %v244, 0
    %v247 = vperm.slane %v244, 1
    %v248 = vperm.slane %v244, 2
    %v249 = vperm.slane %v244, 3
    %v450 = vunpack.c.l.b16 %v48
    %v451 = vunpack.c.h.b16 %v48
    %v452 = vunpack.c.l.b16 %v49
    %v453 = vunpack.c.h.b16 %v49
    %v454 = vunpack.c.l.b16 %v50
    %v455 = vunpack.c.h.b16 %v50
    %v456 = vunpack.c.l.b16 %v51
    %v457 = vunpack.c.h.b16 %v51
    %v458 = vunpack.c.l.b16 %v52
    %v459 = vunpack.c.h.b16 %v52
    %v460 = vunpack.c.l.b16 %v53
    %v461 = vunpack.c.h.b16 %v53
    %v462 = vunpack.c.l.b16 %v54
    %v463 = vunpack.c.h.b16 %v54
    %v464 = vunpack.c.l.b16 %v55
    %v465 = vunpack.c.h.b16 %v55
    %v466 = vunpack.c.l.b16 %v56
    %v467 = vunpack.c.h.b16 %v56
    %v468 = vunpack.c.l.b16 %v57
    %v469 = vunpack.c.h.b16 %v57
    %v470 = vunpack.c.l.b16 %v58
    %v471 = vunpack.c.h.b16 %v58
    %v472 = vunpack.c.l.b16 %v59
    %v473 = vunpack.c.h.b16 %v59
    %v474 = vunpack.c.l.b16 %v60
    %v475 = vunpack.c.h.b16 %v60
    %v476 = vunpack.c.l.b16 %v61
    %v477 = vunpack.c.h.b16 %v61
    %v478 = vunpack.c.l.b16 %v62
    %v479 = vunpack.c.h.b16 %v62
    %v480 = vunpack.c.l.b16 %v63
    %v481 = vunpack.c.h.b16 %v63
    %v482 = vunpack.c.l.b16 %v64
    %v483 = vunpack.c.h.b16 %v64
    %v484 = vunpack.c.l.b16 %v65
    %v485 = vunpack.c.h.b16 %v65
    %v486 = vunpack.c.l.b16 %v66
    %v487 = vunpack.c.h.b16 %v66
    %v488 = vunpack.c.l.b16 %v67
    %v489 = vunpack.c.h.b16 %v67
    %v490 = vunpack.c.l.b16 %v68
    %v491 = vunpack.c.h.b16 %v68
    %v492 = vunpack.c.l.b16 %v69
    %v493 = vunpack.c.h.b16 %v69
    %v494 = vunpack.c.l.b16 %v70
    %v495 = vunpack.c.h.b16 %v70
    %v496 = vunpack.c.l.b16 %v71
    %v497 = vunpack.c.h.b16 %v71
    %v498 = vunpack.c.l.b16 %v72
    %v499 = vunpack.c.h.b16 %v72
    %v500 = vunpack.c.l.b16 %v73
    %v501 = vunpack.c.h.b16 %v73
    %v502 = vunpack.c.l.b16 %v74
    %v503 = vunpack.c.h.b16 %v74
    %v504 = vunpack.c.l.b16 %v75
    %v505 = vunpack.c.h.b16 %v75
    %v506 = vunpack.c.l.b16 %v76
    %v507 = vunpack.c.h.b16 %v76
    %v508 = vunpack.c.l.b16 %v77
    %v509 = vunpack.c.h.b16 %v77
    %v510 = vunpack.c.l.b16 %v78
    %v511 = vunpack.c.h.b16 %v78
    %v512 = vunpack.c.l.b16 %v79
    %v513 = vunpack.c.h.b16 %v79
    %v514 = vunpack.c.l.b16 %v80
    %v515 = vunpack.c.h.b16 %v80
    %v516 = vunpack.c.l.b16 %v81
    %v517 = vunpack.c.h.b16 %v81
    %v518 = vunpack.c.l.b16 %v82
    %v519 = vunpack.c.h.b16 %v82
    %v520 = vunpack.c.l.b16 %v83
    %v521 = vunpack.c.h.b16 %v83
    %v522 = vunpack.c.l.b16 %v84
    %v523 = vunpack.c.h.b16 %v84
    %v524 = vunpack.c.l.b16 %v85
    %v525 = vunpack.c.h.b16 %v85
    %v526 = vunpack.c.l.b16 %v86
    %v527 = vunpack.c.h.b16 %v86
    %v528 = vunpack.c.l.b16 %v87
    %v529 = vunpack.c.h.b16 %v87
    %v530 = vunpack.c.l.b16 %v88
    %v531 = vunpack.c.h.b16 %v88
    %v532 = vunpack.c.l.b16 %v89
    %v533 = vunpack.c.h.b16 %v89
    %v534 = vunpack.c.l.b16 %v90
    %v535 = vunpack.c.h.b16 %v90
    %v536 = vunpack.c.l.b16 %v91
    %v537 = vunpack.c.h.b16 %v91
    %v538 = vunpack.c.l.b16 %v92
    %v539 = vunpack.c.h.b16 %v92
    %v540 = vunpack.c.l.b16 %v93
    %v541 = vunpack.c.h.b16 %v93
    %v542 = vunpack.c.l.b16 %v94
    %v543 = vunpack.c.h.b16 %v94
    %v544 = vunpack.c.l.b16 %v95
    %v545 = vunpack.c.h.b16 %v95
    %v546 = vunpack.c.l.b16 %v96
    %v547 = vunpack.c.h.b16 %v96
    %v548 = vunpack.c.l.b16 %v97
    %v549 = vunpack.c.h.b16 %v97
    %v550 = vunpack.c.l.b16 %v98
    %v551 = vunpack.c.h.b16 %v98
    %v552 = vunpack.c.l.b16 %v99
    %v553 = vunpack.c.h.b16 %v99
    %v554 = vunpack.c.l.b16 %v100
    %v555 = vunpack.c.h.b16 %v100
    %v556 = vunpack.c.l.b16 %v101
    %v557 = vunpack.c.h.b16 %v101
    %v558 = vunpack.c.l.b16 %v102
    %v559 = vunpack.c.h.b16 %v102
    %v560 = vunpack.c.l.b16 %v103
    %v561 = vunpack.c.h.b16 %v103
    %v562 = vunpack.c.l.b16 %v104
    %v563 = vunpack.c.h.b16 %v104
    %v564 = vunpack.c.l.b16 %v105
    %v565 = vunpack.c.h.b16 %v105
    %v566 = vunpack.c.l.b16 %v106
    %v567 = vunpack.c.h.b16 %v106
    %v568 = vunpack.c.l.b16 %v107
    %v569 = vunpack.c.h.b16 %v107
    %v570 = vunpack.c.l.b16 %v108
    %v571 = vunpack.c.h.b16 %v108
    %v572 = vunpack.c.l.b16 %v109
    %v573 = vunpack.c.h.b16 %v109
    %v574 = vunpack.c.l.b16 %v110
    %v575 = vunpack.c.h.b16 %v110
    %v576 = vunpack.c.l.b16 %v111
    %v577 = vunpack.c.h.b16 %v111
    %v578 = vunpack.c.l.b16 %v112
    %v579 = vunpack.c.h.b16 %v112
    %v580 = vunpack.c.l.b16 %v113
    %v581 = vunpack.c.h.b16 %v113
    %v582 = vunpack.c.l.b16 %v114
    %v583 = vunpack.c.h.b16 %v114
    %v584 = vunpack.c.l.b16 %v115
    %v585 = vunpack.c.h.b16 %v115
    %v586 = vunpack.c.l.b16 %v116
    %v587 = vunpack.c.h.b16 %v116
    %v588 = vunpack.c.l.b16 %v117
    %v589 = vunpack.c.h.b16 %v117
    %v590 = vunpack.c.l.b16 %v118
    %v591 = vunpack.c.h.b16 %v118
    %v592 = vunpack.c.l.b16 %v119
    %v593 = vunpack.c.h.b16 %v119
    %v594 = vunpack.c.l.b16 %v120
    %v595 = vunpack.c.h.b16 %v120
    %v596 = vunpack.c.l.b16 %v121
    %v597 = vunpack.c.h.b16 %v121
    %v598 = vunpack.c.l.b16 %v122
    %v599 = vunpack.c.h.b16 %v122
    %v600 = vunpack.c.l.b16 %v123
    %v601 = vunpack.c.h.b16 %v123
    %v602 = vunpack.c.l.b16 %v124
    %v603 = vunpack.c.h.b16 %v124
    %v604 = vunpack.c.l.b16 %v125
    %v605 = vunpack.c.h.b16 %v125
    %v606 = vunpack.c.l.b16 %v126
    %v607 = vunpack.c.h.b16 %v126
    %v608 = vunpack.c.l.b16 %v127
    %v609 = vunpack.c.h.b16 %v127
    %v610 = vunpack.c.l.b16 %v128
    %v611 = vunpack.c.h.b16 %v128
    %v612 = vunpack.c.l.b16 %v129
    %v613 = vunpack.c.h.b16 %v129
    %v614 = vunpack.c.l.b16 %v130
    %v615 = vunpack.c.h.b16 %v130
    %v616 = vunpack.c.l.b16 %v131
    %v617 = vunpack.c.h.b16 %v131
    %v618 = vunpack.c.l.b16 %v132
    %v619 = vunpack.c.h.b16 %v132
    %v620 = vunpack.c.l.b16 %v133
    %v621 = vunpack.c.h.b16 %v133
    %v622 = vunpack.c.l.b16 %v134
    %v623 = vunpack.c.h.b16 %v134
    %v624 = vunpack.c.l.b16 %v135
    %v625 = vunpack.c.h.b16 %v135
    %v626 = vunpack.c.l.b16 %v136
    %v627 = vunpack.c.h.b16 %v136
    %v628 = vunpack.c.l.b16 %v137
    %v629 = vunpack.c.h.b16 %v137
    %v630 = vunpack.c.l.b16 %v138
    %v631 = vunpack.c.h.b16 %v138
    %v632 = vunpack.c.l.b16 %v139
    %v633 = vunpack.c.h.b16 %v139
    %v634 = vunpack.c.l.b16 %v140
    %v635 = vunpack.c.h.b16 %v140
    %v636 = vunpack.c.l.b16 %v141
    %v637 = vunpack.c.h.b16 %v141
    %v638 = vunpack.c.l.b16 %v142
    %v639 = vunpack.c.h.b16 %v142
    %v640 = vunpack.c.l.b16 %v143
    %v641 = vunpack.c.h.b16 %v143
    %v642 = vunpack.c.l.b16 %v144
    %v643 = vunpack.c.h.b16 %v144
    %v644 = vunpack.c.l.b16 %v145
    %v645 = vunpack.c.h.b16 %v145
    %v646 = vunpack.c.l.b16 %v146
    %v647 = vunpack.c.h.b16 %v146
    %v648 = vunpack.c.l.b16 %v147
    %v649 = vunpack.c.h.b16 %v147
    %v650 = vunpack.c.l.b16 %v148
    %v651 = vunpack.c.h.b16 %v148
    %v652 = vunpack.c.l.b16 %v149
    %v653 = vunpack.c.h.b16 %v149
    %v654 = vunpack.c.l.b16 %v150
    %v655 = vunpack.c.h.b16 %v150
    %v656 = vunpack.c.l.b16 %v151
    %v657 = vunpack.c.h.b16 %v151
    %v658 = vunpack.c.l.b16 %v152
    %v659 = vunpack.c.h.b16 %v152
    %v660 = vunpack.c.l.b16 %v153
    %v661 = vunpack.c.h.b16 %v153
    %v662 = vunpack.c.l.b16 %v154
    %v663 = vunpack.c.h.b16 %v154
    %v664 = vunpack.c.l.b16 %v155
    %v665 = vunpack.c.h.b16 %v155
    %v666 = vunpack.c.l.b16 %v156
    %v667 = vunpack.c.h.b16 %v156
    %v668 = vunpack.c.l.b16 %v157
    %v669 = vunpack.c.h.b16 %v157
    %v670 = vunpack.c.l.b16 %v158
    %v671 = vunpack.c.h.b16 %v158
    %v672 = vunpack.c.l.b16 %v159
    %v673 = vunpack.c.h.b16 %v159
    %v674 = vunpack.c.l.b16 %v160
    %v675 = vunpack.c.h.b16 %v160
    %v676 = vunpack.c.l.b16 %v161
    %v677 = vunpack.c.h.b16 %v161
    %v678 = vunpack.c.l.b16 %v162
    %v679 = vunpack.c.h.b16 %v162
    %v680 = vunpack.c.l.b16 %v163
    %v681 = vunpack.c.h.b16 %v163
    %v682 = vunpack.c.l.b16 %v164
    %v683 = vunpack.c.h.b16 %v164
    %v684 = vunpack.c.l.b16 %v165
    %v685 = vunpack.c.h.b16 %v165
    %v686 = vunpack.c.l.b16 %v166
    %v687 = vunpack.c.h.b16 %v166
    %v688 = vunpack.c.l.b16 %v167
    %v689 = vunpack.c.h.b16 %v167
    %v690 = vunpack.c.l.b16 %v168
    %v691 = vunpack.c.h.b16 %v168
    %v692 = vunpack.c.l.b16 %v169
    %v693 = vunpack.c.h.b16 %v169
    %v694 = vunpack.c.l.b16 %v170
    %v695 = vunpack.c.h.b16 %v170
    %v696 = vunpack.c.l.b16 %v171
    %v697 = vunpack.c.h.b16 %v171
    %v698 = vunpack.c.l.b16 %v172
    %v699 = vunpack.c.h.b16 %v172
    %v700 = vunpack.c.l.b16 %v173
    %v701 = vunpack.c.h.b16 %v173
    %v702 = vunpack.c.l.b16 %v174
    %v703 = vunpack.c.h.b16 %v174
    %v704 = vunpack.c.l.b16 %v175
    %v705 = vunpack.c.h.b16 %v175
    %v706 = vunpack.c.l.b16 %v176
    %v707 = vunpack.c.h.b16 %v176
    %v708 = vunpack.c.l.b16 %v177
    %v709 = vunpack.c.h.b16 %v177
    %v710 = vunpack.c.l.b16 %v178
    %v711 = vunpack.c.h.b16 %v178
    %v712 = vunpack.c.l.b16 %v179
    %v713 = vunpack.c.h.b16 %v179
    %v714 = vunpack.c.l.b16 %v180
    %v715 = vunpack.c.h.b16 %v180
    %v716 = vunpack.c.l.b16 %v181
    %v717 = vunpack.c.h.b16 %v181
    %v718 = vunpack.c.l.b16 %v182
    %v719 = vunpack.c.h.b16 %v182
    %v720 = vunpack.c.l.b16 %v183
    %v721 = vunpack.c.h.b16 %v183
    %v722 = vunpack.c.l.b16 %v184
    %v723 = vunpack.c.h.b16 %v184
    %v724 = vunpack.c.l.b16 %v185
    %v725 = vunpack.c.h.b16 %v185
    %v726 = vunpack.c.l.b16 %v186
    %v727 = vunpack.c.h.b16 %v186
    %v728 = vunpack.c.l.b16 %v187
    %v729 = vunpack.c.h.b16 %v187
    %v730 = vunpack.c.l.b16 %v188
    %v731 = vunpack.c.h.b16 %v188
    %v732 = vunpack.c.l.b16 %v189
    %v733 = vunpack.c.h.b16 %v189
    %v734 = vunpack.c.l.b16 %v190
    %v735 = vunpack.c.h.b16 %v190
    %v736 = vunpack.c.l.b16 %v191
    %v737 = vunpack.c.h.b16 %v191
    %v738 = vunpack.c.l.b16 %v192
    %v739 = vunpack.c.h.b16 %v192
    %v740 = vunpack.c.l.b16 %v193
    %v741 = vunpack.c.h.b16 %v193
    %v742 = vunpack.c.l.b16 %v194
    %v743 = vunpack.c.h.b16 %v194
    %v744 = vunpack.c.l.b16 %v195
    %v745 = vunpack.c.h.b16 %v195
    %v746 = vunpack.c.l.b16 %v196
    %v747 = vunpack.c.h.b16 %v196
    %v748 = vunpack.c.l.b16 %v197
    %v749 = vunpack.c.h.b16 %v197
    %v750 = vunpack.c.l.b16 %v198
    %v751 = vunpack.c.h.b16 %v198
    %v752 = vunpack.c.l.b16 %v199
    %v753 = vunpack.c.h.b16 %v199
    %v754 = vunpack.c.l.b16 %v200
    %v755 = vunpack.c.h.b16 %v200
    %v756 = vunpack.c.l.b16 %v201
    %v757 = vunpack.c.h.b16 %v201
    %v758 = vunpack.c.l.b16 %v202
    %v759 = vunpack.c.h.b16 %v202
    %v760 = vunpack.c.l.b16 %v203
    %v761 = vunpack.c.h.b16 %v203
    %v762 = vunpack.c.l.b16 %v204
    %v763 = vunpack.c.h.b16 %v204
    %v764 = vunpack.c.l.b16 %v205
    %v765 = vunpack.c.h.b16 %v205
    %v766 = vunpack.c.l.b16 %v206
    %v767 = vunpack.c.h.b16 %v206
    %v768 = vunpack.c.l.b16 %v207
    %v769 = vunpack.c.h.b16 %v207
    %v770 = vunpack.c.l.b16 %v208
    %v771 = vunpack.c.h.b16 %v208
    %v772 = vunpack.c.l.b16 %v209
    %v773 = vunpack.c.h.b16 %v209
    %v774 = vunpack.c.l.b16 %v210
    %v775 = vunpack.c.h.b16 %v210
    %v776 = vunpack.c.l.b16 %v211
    %v777 = vunpack.c.h.b16 %v211
    %v778 = vunpack.c.l.b16 %v212
    %v779 = vunpack.c.h.b16 %v212
    %v780 = vunpack.c.l.b16 %v213
    %v781 = vunpack.c.h.b16 %v213
    %v782 = vunpack.c.l.b16 %v214
    %v783 = vunpack.c.h.b16 %v214
    %v784 = vunpack.c.l.b16 %v215
    %v785 = vunpack.c.h.b16 %v215
    %v786 = vunpack.c.l.b16 %v216
    %v787 = vunpack.c.h.b16 %v216
    %v788 = vunpack.c.l.b16 %v217
    %v789 = vunpack.c.h.b16 %v217
    %v790 = vunpack.c.l.b16 %v218
    %v791 = vunpack.c.h.b16 %v218
    %v792 = vunpack.c.l.b16 %v219
    %v793 = vunpack.c.h.b16 %v219
    %v794 = vunpack.c.l.b16 %v220
    %v795 = vunpack.c.h.b16 %v220
    %v796 = vunpack.c.l.b16 %v221
    %v797 = vunpack.c.h.b16 %v221
    %v798 = vunpack.c.l.b16 %v222
    %v799 = vunpack.c.h.b16 %v222
    %v800 = vunpack.c.l.b16 %v223
    %v801 = vunpack.c.h.b16 %v223
    %v802 = vunpack.c.l.b16 %v224
    %v803 = vunpack.c.h.b16 %v224
    %v804 = vunpack.c.l.b16 %v225
    %v805 = vunpack.c.h.b16 %v225
    %v806 = vunpack.c.l.b16 %v226
    %v807 = vunpack.c.h.b16 %v226
    %v808 = vunpack.c.l.b16 %v227
    %v809 = vunpack.c.h.b16 %v227
    %v810 = vunpack.c.l.b16 %v228
    %v811 = vunpack.c.h.b16 %v228
    %v812 = vunpack.c.l.b16 %v229
    %v813 = vunpack.c.h.b16 %v229
    %v814 = vunpack.c.l.b16 %v230
    %v815 = vunpack.c.h.b16 %v230
    %v816 = vunpack.c.l.b16 %v231
    %v817 = vunpack.c.h.b16 %v231
    %v818 = vunpack.c.l.b16 %v232
    %v819 = vunpack.c.h.b16 %v232
    %v820 = vunpack.c.l.b16 %v233
    %v821 = vunpack.c.h.b16 %v233
    %v822 = vunpack.c.l.b16 %v234
    %v823 = vunpack.c.h.b16 %v234
    %v824 = vunpack.c.l.b16 %v235
    %v825 = vunpack.c.h.b16 %v235
    %v826 = vunpack.c.l.b16 %v236
    %v827 = vunpack.c.h.b16 %v236
    %v828 = vunpack.c.l.b16 %v237
    %v829 = vunpack.c.h.b16 %v237
    %v830 = vunpack.c.l.b16 %v238
    %v831 = vunpack.c.h.b16 %v238
    %v832 = vunpack.c.l.b16 %v239
    %v833 = vunpack.c.h.b16 %v239
    %v834 = vunpack.c.l.b16 %v240
    %v835 = vunpack.c.h.b16 %v240
    %v836 = vunpack.c.l.b16 %v241
    %v837 = vunpack.c.h.b16 %v241
    %v838 = vunpack.c.l.b16 %v242
    %v839 = vunpack.c.h.b16 %v242
    %v840 = vunpack.c.l.b16 %v243
    %v841 = vunpack.c.h.b16 %v243
    %v842 = vpack.c.b16 %v454, %v450
    %v843 = vpack.c.b16 %v455, %v451
    %v844 = vpack.c.b16 %v456, %v452
    %v845 = vpack.c.b16 %v457, %v453
    %v846 = vpack.c.b16 %v462, %v458
    %v847 = vpack.c.b16 %v463, %v459
    %v848 = vpack.c.b16 %v464, %v460
    %v849 = vpack.c.b16 %v465, %v461
    %v850 = vpack.c.b16 %v470, %v466
    %v851 = vpack.c.b16 %v471, %v467
    %v852 = vpack.c.b16 %v472, %v468
    %v853 = vpack.c.b16 %v473, %v469
    %v854 = vpack.c.b16 %v478, %v474
    %v855 = vpack.c.b16 %v479, %v475
    %v856 = vpack.c.b16 %v480, %v476
    %v857 = vpack.c.b16 %v481, %v477
    %v858 = vpack.c.b16 %v486, %v482
    %v859 = vpack.c.b16 %v487, %v483
    %v860 = vpack.c.b16 %v488, %v484
    %v861 = vpack.c.b16 %v489, %v485
    %v862 = vpack.c.b16 %v494, %v490
    %v863 = vpack.c.b16 %v495, %v491
    %v864 = vpack.c.b16 %v496, %v492
    %v865 = vpack.c.b16 %v497, %v493
    %v866 = vpack.c.b16 %v502, %v498
    %v867 = vpack.c.b16 %v503, %v499
    %v868 = vpack.c.b16 %v504, %v500
    %v869 = vpack.c.b16 %v505, %v501
    %v870 = vpack.c.b16 %v510, %v506
    %v871 = vpack.c.b16 %v511, %v507
    %v872 = vpack.c.b16 %v512, %v508
    %v873 = vpack.c.b16 %v513, %v509
    %v874 = vpack.c.b16 %v518, %v514
    %v875 = vpack.c.b16 %v519, %v515
    %v876 = vpack.c.b16 %v520, %v516
    %v877 = vpack.c.b16 %v521, %v517
    %v878 = vpack.c.b16 %v526, %v522
    %v879 = vpack.c.b16 %v527, %v523
    %v880 = vpack.c.b16 %v528, %v524
    %v881 = vpack.c.b16 %v529, %v525
    %v882 = vpack.c.b16 %v534, %v530
    %v883 = vpack.c.b16 %v535, %v531
    %v884 = vpack.c.b16 %v536, %v532
    %v885 = vpack.c.b16 %v537, %v533
    %v886 = vpack.c.b16 %v542, %v538
    %v887 = vpack.c.b16 %v543, %v539
    %v888 = vpack.c.b16 %v544, %v540
    %v889 = vpack.c.b16 %v545, %v541
    %v890 = vpack.c.b16 %v550, %v546
    %v891 = vpack.c.b16 %v551, %v547
    %v892 = vpack.c.b16 %v552, %v548
    %v893 = vpack.c.b16 %v553, %v549
    %v894 = vpack.c.b16 %v558, %v554
    %v895 = vpack.c.b16 %v559, %v555
    %v896 = vpack.c.b16 %v560, %v556
    %v897 = vpack.c.b16 %v561, %v557
    %v898 = vpack.c.b16 %v566, %v562
    %v899 = vpack.c.b16 %v567, %v563
    %v900 = vpack.c.b16 %v568, %v564
    %v901 = vpack.c.b16 %v569, %v565
    %v902 = vpack.c.b16 %v574, %v570
    %v903 = vpack.c.b16 %v575, %v571
    %v904 = vpack.c.b16 %v576, %v572
    %v905 = vpack.c.b16 %v577, %v573
    %v906 = vpack.c.b16 %v582, %v578
    %v907 = vpack.c.b16 %v583, %v579
    %v908 = vpack.c.b16 %v584, %v580
    %v909 = vpack.c.b16 %v585, %v581
    %v910 = vpack.c.b16 %v590, %v586
    %v911 = vpack.c.b16 %v591, %v587
    %v912 = vpack.c.b16 %v592, %v588
    %v913 = vpack.c.b16 %v593, %v589
    %v914 = vpack.c.b16 %v598, %v594
    %v915 = vpack.c.b16 %v599, %v595
    %v916 = vpack.c.b16 %v600, %v596
    %v917 = vpack.c.b16 %v601, %v597
    %v918 = vpack.c.b16 %v606, %v602
    %v919 = vpack.c.b16 %v607, %v603
    %v920 = vpack.c.b16 %v608, %v604
    %v921 = vpack.c.b16 %v609, %v605
    %v922 = vpack.c.b16 %v614, %v610
    %v923 = vpack.c.b16 %v615, %v611
    %v924 = vpack.c.b16 %v616, %v612
    %v925 = vpack.c.b16 %v617, %v613
    %v926 = vpack.c.b16 %v622, %v618
    %v927 = vpack.c.b16 %v623, %v619
    %v928 = vpack.c.b16 %v624, %v620
    %v929 = vpack.c.b16 %v625, %v621
    %v930 = vpack.c.b16 %v630, %v626
    %v931 = vpack.c.b16 %v631, %v627
    %v932 = vpack.c.b16 %v632, %v628
    %v933 = vpack.c.b16 %v633, %v629
    %v934 = vpack.c.b16 %v638, %v634
    %v935 = vpack.c.b16 %v639, %v635
    %v936 = vpack.c.b16 %v640, %v636
    %v937 = vpack.c.b16 %v641, %v637
    %v938 = vpack.c.b16 %v646, %v642
    %v939 = vpack.c.b16 %v647, %v643
    %v940 = vpack.c.b16 %v648, %v644
    %v941 = vpack.c.b16 %v649, %v645
    %v942 = vpack.c.b16 %v654, %v650
    %v943 = vpack.c.b16 %v655, %v651
    %v944 = vpack.c.b16 %v656, %v652
    %v945 = vpack.c.b16 %v657, %v653
    %v946 = vpack.c.b16 %v662, %v658
    %v947 = vpack.c.b16 %v663, %v659
    %v948 = vpack.c.b16 %v664, %v660
    %v949 = vpack.c.b16 %v665, %v661
    %v950 = vpack.c.b16 %v670, %v666
    %v951 = vpack.c.b16 %v671, %v667
    %v952 = vpack.c.b16 %v672, %v668
    %v953 = vpack.c.b16 %v673, %v669
    %v954 = vpack.c.b16 %v678, %v674
    %v955 = vpack.c.b16 %v679, %v675
    %v956 = vpack.c.b16 %v680, %v676
    %v957 = vpack.c.b16 %v681, %v677
    %v958 = vpack.c.b16 %v686, %v682
    %v959 = vpack.c.b16 %v687, %v683
    %v960 = vpack.c.b16 %v688, %v684
    %v961 = vpack.c.b16 %v689, %v685
    %v962 = vpack.c.b16 %v694, %v690
    %v963 = vpack.c.b16 %v695, %v691
    %v964 = vpack.c.b16 %v696, %v692
    %v965 = vpack.c.b16 %v697, %v693
    %v966 = vpack.c.b16 %v702, %v698
    %v967 = vpack.c.b16 %v703, %v699
    %v968 = vpack.c.b16 %v704, %v700
    %v969 = vpack.c.b16 %v705, %v701
    %v970 = vpack.c.b16 %v710, %v706
    %v971 = vpack.c.b16 %v711, %v707
    %v972 = vpack.c.b16 %v712, %v708
    %v973 = vpack.c.b16 %v713, %v709
    %v974 = vpack.c.b16 %v718, %v714
    %v975 = vpack.c.b16 %v719, %v715
    %v976 = vpack.c.b16 %v720, %v716
    %v977 = vpack.c.b16 %v721, %v717
    %v978 = vpack.c.b16 %v726, %v722
    %v979 = vpack.c.b16 %v727, %v723
    %v980 = vpack.c.b16 %v728, %v724
    %v981 = vpack.c.b16 %v729, %v725
    %v982 = vpack.c.b16 %v734, %v730
    %v983 = vpack.c.b16 %v735, %v731
    %v984 = vpack.c.b16 %v736, %v732
    %v985 = vpack.c.b16 %v737, %v733
    %v986 = vpack.c.b16 %v742, %v738
    %v987 = vpack.c.b16 %v743, %v739
    %v988 = vpack.c.b16 %v744, %v740
    %v989 = vpack.c.b16 %v745, %v741
    %v990 = vpack.c.b16 %v750, %v746
    %v991 = vpack.c.b16 %v751, %v747
    %v992 = vpack.c.b16 %v752, %v748
    %v993 = vpack.c.b16 %v753, %v749
    %v994 = vpack.c.b16 %v758, %v754
    %v995 = vpack.c.b16 %v759, %v755
    %v996 = vpack.c.b16 %v760, %v756
    %v997 = vpack.c.b16 %v761, %v757
    %v998 = vpack.c.b16 %v766, %v762
    %v999 = vpack.c.b16 %v767, %v763
    %v1000 = vpack.c.b16 %v768, %v764
    %v1001 = vpack.c.b16 %v769, %v765
    %v1002 = vpack.c.b16 %v774, %v770
    %v1003 = vpack.c.b16 %v775, %v771
    %v1004 = vpack.c.b16 %v776, %v772
    %v1005 = vpack.c.b16 %v777, %v773
    %v1006 = vpack.c.b16 %v782, %v778
    %v1007 = vpack.c.b16 %v783, %v779
    %v1008 = vpack.c.b16 %v784, %v780
    %v1009 = vpack.c.b16 %v785, %v781
    %v1010 = vpack.c.b16 %v790, %v786
    %v1011 = vpack.c.b16 %v791, %v787
    %v1012 = vpack.c.b16 %v792, %v788
    %v1013 = vpack.c.b16 %v793, %v789
    %v1014 = vpack.c.b16 %v798, %v794
    %v1015 = vpack.c.b16 %v799, %v795
    %v1016 = vpack.c.b16 %v800, %v796
    %v1017 = vpack.c.b16 %v801, %v797
    %v1018 = vpack.c.b16 %v806, %v802
    %v1019 = vpack.c.b16 %v807, %v803
    %v1020 = vpack.c.b16 %v808, %v804
    %v1021 = vpack.c.b16 %v809, %v805
    %v1022 = vpack.c.b16 %v814, %v810
    %v1023 = vpack.c.b16 %v815, %v811
    %v1024 = vpack.c.b16 %v816, %v812
    %v1025 = vpack.c.b16 %v817, %v813
    %v1026 = vpack.c.b16 %v822, %v818
    %v1027 = vpack.c.b16 %v823, %v819
    %v1028 = vpack.c.b16 %v824, %v820
    %v1029 = vpack.c.b16 %v825, %v821
    %v1030 = vpack.c.b16 %v830, %v826
    %v1031 = vpack.c.b16 %v831, %v827
    %v1032 = vpack.c.b16 %v832, %v828
    %v1033 = vpack.c.b16 %v833, %v829
    %v1034 = vpack.c.b16 %v838, %v834
    %v1035 = vpack.c.b16 %v839, %v835
    %v1036 = vpack.c.b16 %v840, %v836
    %v1037 = vpack.c.b16 %v841, %v837
    %vm1234 = vcmask 130048
    %v1236 = vsel %vm1234, %v47, 0
    %1238 = vmatpush.bf16.msra.mxu0 %v870
    %1239 = vmatpush.bf16.msra.mxu0 %v866
    %1240 = vmatpush.bf16.msra.mxu0 %v862
    %1241 = vmatpush.bf16.msra.mxu0 %v858
    %1242 = vmatpush.bf16.msra.mxu0 %v854
    %1243 = vmatpush.bf16.msra.mxu0 %v850
    %1244 = vmatpush.bf16.msra.mxu0 %v846
    %1245 = vmatpush.bf16.msra.mxu0 %v842
    %1246 = vmatmul.bf16.gmra.mxu0 %v41
    %v1247 = vpop.f32.mrf.mxu0
    %v1248 = vadd.f32 %v246, %v1247
    %v1249 = vpop.f32.mrf.mxu0
    %1250 = vdwg.mxu0
    %1251 = vmatpush.bf16.msra.mxu0 %v902
    %1252 = vmatpush.bf16.msra.mxu0 %v898
    %1253 = vmatpush.bf16.msra.mxu0 %v894
    %1254 = vmatpush.bf16.msra.mxu0 %v890
    %1255 = vmatpush.bf16.msra.mxu0 %v886
    %1256 = vmatpush.bf16.msra.mxu0 %v882
    %1257 = vmatpush.bf16.msra.mxu0 %v878
    %1258 = vmatpush.bf16.msra.mxu0 %v874
    %1259 = vmatmul.bf16.gmra.mxu0 %v42
    %v1260 = vpop.f32.mrf.mxu0
    %v1261 = vadd.f32 %v1248, %v1260
    %v1262 = vpop.f32.mrf.mxu0
    %1263 = vdwg.mxu0
    %1264 = vmatpush.bf16.msra.mxu0 %v934
    %1265 = vmatpush.bf16.msra.mxu0 %v930
    %1266 = vmatpush.bf16.msra.mxu0 %v926
    %1267 = vmatpush.bf16.msra.mxu0 %v922
    %1268 = vmatpush.bf16.msra.mxu0 %v918
    %1269 = vmatpush.bf16.msra.mxu0 %v914
    %1270 = vmatpush.bf16.msra.mxu0 %v910
    %1271 = vmatpush.bf16.msra.mxu0 %v906
    %1272 = vmatmul.bf16.gmra.mxu0 %v43
    %v1273 = vpop.f32.mrf.mxu0
    %v1274 = vadd.f32 %v1261, %v1273
    %v1275 = vpop.f32.mrf.mxu0
    %1276 = vdwg.mxu0
    %1277 = vmatpush.bf16.msra.mxu0 %v966
    %1278 = vmatpush.bf16.msra.mxu0 %v962
    %1279 = vmatpush.bf16.msra.mxu0 %v958
    %1280 = vmatpush.bf16.msra.mxu0 %v954
    %1281 = vmatpush.bf16.msra.mxu0 %v950
    %1282 = vmatpush.bf16.msra.mxu0 %v946
    %1283 = vmatpush.bf16.msra.mxu0 %v942
    %1284 = vmatpush.bf16.msra.mxu0 %v938
    %1285 = vmatmul.bf16.gmra.mxu0 %v44
    %v1286 = vpop.f32.mrf.mxu0
    %v1287 = vadd.f32 %v1274, %v1286
    %v1288 = vpop.f32.mrf.mxu0
    %1289 = vdwg.mxu0
    %1290 = vmatpush.bf16.msra.mxu0 %v998
    %1291 = vmatpush.bf16.msra.mxu0 %v994
    %1292 = vmatpush.bf16.msra.mxu0 %v990
    %1293 = vmatpush.bf16.msra.mxu0 %v986
    %1294 = vmatpush.bf16.msra.mxu0 %v982
    %1295 = vmatpush.bf16.msra.mxu0 %v978
    %1296 = vmatpush.bf16.msra.mxu0 %v974
    %1297 = vmatpush.bf16.msra.mxu0 %v970
    %1298 = vmatmul.bf16.gmra.mxu0 %v45
    %v1299 = vpop.f32.mrf.mxu0
    %v1300 = vadd.f32 %v1287, %v1299
    %v1301 = vpop.f32.mrf.mxu0
    %1302 = vdwg.mxu0
    %1303 = vmatpush.bf16.msra.mxu0 %v1030
    %1304 = vmatpush.bf16.msra.mxu0 %v1026
    %1305 = vmatpush.bf16.msra.mxu0 %v1022
    %1306 = vmatpush.bf16.msra.mxu0 %v1018
    %1307 = vmatpush.bf16.msra.mxu0 %v1014
    %1308 = vmatpush.bf16.msra.mxu0 %v1010
    %1309 = vmatpush.bf16.msra.mxu0 %v1006
    %1310 = vmatpush.bf16.msra.mxu0 %v1002
    %1311 = vmatmul.bf16.gmra.mxu0 %v46
    %v1312 = vpop.f32.mrf.mxu0
    %v1313 = vadd.f32 %v1300, %v1312
    %v1314 = vpop.f32.mrf.mxu0
    %1315 = vdwg.mxu0
    %1316 = vmatpush.bf16.msra.mxu0 0
    %1317 = vmatpush.bf16.msra.mxu0 0
    %1318 = vmatpush.bf16.msra.mxu0 0
    %1319 = vmatpush.bf16.msra.mxu0 0
    %1320 = vmatpush.bf16.msra.mxu0 0
    %1321 = vmatpush.bf16.msra.mxu0 0
    %1322 = vmatpush.bf16.msra.mxu0 0
    %1323 = vmatpush.bf16.msra.mxu0 %v1034
    %1324 = vmatmul.bf16.gmra.mxu0 %v1236
    %v1325 = vpop.f32.mrf.mxu0
    %v1326 = vadd.f32 %v1313, %v1325
    %v1327 = vpop.f32.mrf.mxu0
    %1328 = vdwg.mxu0
    %1329 = vmatpush.bf16.msra.mxu0 %v871
    %1330 = vmatpush.bf16.msra.mxu0 %v867
    %1331 = vmatpush.bf16.msra.mxu0 %v863
    %1332 = vmatpush.bf16.msra.mxu0 %v859
    %1333 = vmatpush.bf16.msra.mxu0 %v855
    %1334 = vmatpush.bf16.msra.mxu0 %v851
    %1335 = vmatpush.bf16.msra.mxu0 %v847
    %1336 = vmatpush.bf16.msra.mxu0 %v843
    %1337 = vmatmul.bf16.gmra.mxu0 %v41
    %v1338 = vpop.f32.mrf.mxu0
    %v1339 = vadd.f32 %v247, %v1338
    %v1340 = vpop.f32.mrf.mxu0
    %1341 = vdwg.mxu0
    %1342 = vmatpush.bf16.msra.mxu0 %v903
    %1343 = vmatpush.bf16.msra.mxu0 %v899
    %1344 = vmatpush.bf16.msra.mxu0 %v895
    %1345 = vmatpush.bf16.msra.mxu0 %v891
    %1346 = vmatpush.bf16.msra.mxu0 %v887
    %1347 = vmatpush.bf16.msra.mxu0 %v883
    %1348 = vmatpush.bf16.msra.mxu0 %v879
    %1349 = vmatpush.bf16.msra.mxu0 %v875
    %1350 = vmatmul.bf16.gmra.mxu0 %v42
    %v1351 = vpop.f32.mrf.mxu0
    %v1352 = vadd.f32 %v1339, %v1351
    %v1353 = vpop.f32.mrf.mxu0
    %1354 = vdwg.mxu0
    %1355 = vmatpush.bf16.msra.mxu0 %v935
    %1356 = vmatpush.bf16.msra.mxu0 %v931
    %1357 = vmatpush.bf16.msra.mxu0 %v927
    %1358 = vmatpush.bf16.msra.mxu0 %v923
    %1359 = vmatpush.bf16.msra.mxu0 %v919
    %1360 = vmatpush.bf16.msra.mxu0 %v915
    %1361 = vmatpush.bf16.msra.mxu0 %v911
    %1362 = vmatpush.bf16.msra.mxu0 %v907
    %1363 = vmatmul.bf16.gmra.mxu0 %v43
    %v1364 = vpop.f32.mrf.mxu0
    %v1365 = vadd.f32 %v1352, %v1364
    %v1366 = vpop.f32.mrf.mxu0
    %1367 = vdwg.mxu0
    %1368 = vmatpush.bf16.msra.mxu0 %v967
    %1369 = vmatpush.bf16.msra.mxu0 %v963
    %1370 = vmatpush.bf16.msra.mxu0 %v959
    %1371 = vmatpush.bf16.msra.mxu0 %v955
    %1372 = vmatpush.bf16.msra.mxu0 %v951
    %1373 = vmatpush.bf16.msra.mxu0 %v947
    %1374 = vmatpush.bf16.msra.mxu0 %v943
    %1375 = vmatpush.bf16.msra.mxu0 %v939
    %1376 = vmatmul.bf16.gmra.mxu0 %v44
    %v1377 = vpop.f32.mrf.mxu0
    %v1378 = vadd.f32 %v1365, %v1377
    %v1379 = vpop.f32.mrf.mxu0
    %1380 = vdwg.mxu0
    %1381 = vmatpush.bf16.msra.mxu0 %v999
    %1382 = vmatpush.bf16.msra.mxu0 %v995
    %1383 = vmatpush.bf16.msra.mxu0 %v991
    %1384 = vmatpush.bf16.msra.mxu0 %v987
    %1385 = vmatpush.bf16.msra.mxu0 %v983
    %1386 = vmatpush.bf16.msra.mxu0 %v979
    %1387 = vmatpush.bf16.msra.mxu0 %v975
    %1388 = vmatpush.bf16.msra.mxu0 %v971
    %1389 = vmatmul.bf16.gmra.mxu0 %v45
    %v1390 = vpop.f32.mrf.mxu0
    %v1391 = vadd.f32 %v1378, %v1390
    %v1392 = vpop.f32.mrf.mxu0
    %1393 = vdwg.mxu0
    %1394 = vmatpush.bf16.msra.mxu0 %v1031
    %1395 = vmatpush.bf16.msra.mxu0 %v1027
    %1396 = vmatpush.bf16.msra.mxu0 %v1023
    %1397 = vmatpush.bf16.msra.mxu0 %v1019
    %1398 = vmatpush.bf16.msra.mxu0 %v1015
    %1399 = vmatpush.bf16.msra.mxu0 %v1011
    %1400 = vmatpush.bf16.msra.mxu0 %v1007
    %1401 = vmatpush.bf16.msra.mxu0 %v1003
    %1402 = vmatmul.bf16.gmra.mxu0 %v46
    %v1403 = vpop.f32.mrf.mxu0
    %v1404 = vadd.f32 %v1391, %v1403
    %v1405 = vpop.f32.mrf.mxu0
    %1406 = vdwg.mxu0
    %1407 = vmatpush.bf16.msra.mxu0 0
    %1408 = vmatpush.bf16.msra.mxu0 0
    %1409 = vmatpush.bf16.msra.mxu0 0
    %1410 = vmatpush.bf16.msra.mxu0 0
    %1411 = vmatpush.bf16.msra.mxu0 0
    %1412 = vmatpush.bf16.msra.mxu0 0
    %1413 = vmatpush.bf16.msra.mxu0 0
    %1414 = vmatpush.bf16.msra.mxu0 %v1035
    %1415 = vmatmul.bf16.gmra.mxu0 %v1236
    %v1416 = vpop.f32.mrf.mxu0
    %v1417 = vadd.f32 %v1404, %v1416
    %v1418 = vpop.f32.mrf.mxu0
    %1419 = vdwg.mxu0
    %1420 = vmatpush.bf16.msra.mxu0 %v872
    %1421 = vmatpush.bf16.msra.mxu0 %v868
    %1422 = vmatpush.bf16.msra.mxu0 %v864
    %1423 = vmatpush.bf16.msra.mxu0 %v860
    %1424 = vmatpush.bf16.msra.mxu0 %v856
    %1425 = vmatpush.bf16.msra.mxu0 %v852
    %1426 = vmatpush.bf16.msra.mxu0 %v848
    %1427 = vmatpush.bf16.msra.mxu0 %v844
    %1428 = vmatmul.bf16.gmra.mxu0 %v41
    %v1429 = vpop.f32.mrf.mxu0
    %v1430 = vadd.f32 %v248, %v1429
    %v1431 = vpop.f32.mrf.mxu0
    %1432 = vdwg.mxu0
    %1433 = vmatpush.bf16.msra.mxu0 %v904
    %1434 = vmatpush.bf16.msra.mxu0 %v900
    %1435 = vmatpush.bf16.msra.mxu0 %v896
    %1436 = vmatpush.bf16.msra.mxu0 %v892
    %1437 = vmatpush.bf16.msra.mxu0 %v888
    %1438 = vmatpush.bf16.msra.mxu0 %v884
    %1439 = vmatpush.bf16.msra.mxu0 %v880
    %1440 = vmatpush.bf16.msra.mxu0 %v876
    %1441 = vmatmul.bf16.gmra.mxu0 %v42
    %v1442 = vpop.f32.mrf.mxu0
    %v1443 = vadd.f32 %v1430, %v1442
    %v1444 = vpop.f32.mrf.mxu0
    %1445 = vdwg.mxu0
    %1446 = vmatpush.bf16.msra.mxu0 %v936
    %1447 = vmatpush.bf16.msra.mxu0 %v932
    %1448 = vmatpush.bf16.msra.mxu0 %v928
    %1449 = vmatpush.bf16.msra.mxu0 %v924
    %1450 = vmatpush.bf16.msra.mxu0 %v920
    %1451 = vmatpush.bf16.msra.mxu0 %v916
    %1452 = vmatpush.bf16.msra.mxu0 %v912
    %1453 = vmatpush.bf16.msra.mxu0 %v908
    %1454 = vmatmul.bf16.gmra.mxu0 %v43
    %v1455 = vpop.f32.mrf.mxu0
    %v1456 = vadd.f32 %v1443, %v1455
    %v1457 = vpop.f32.mrf.mxu0
    %1458 = vdwg.mxu0
    %1459 = vmatpush.bf16.msra.mxu0 %v968
    %1460 = vmatpush.bf16.msra.mxu0 %v964
    %1461 = vmatpush.bf16.msra.mxu0 %v960
    %1462 = vmatpush.bf16.msra.mxu0 %v956
    %1463 = vmatpush.bf16.msra.mxu0 %v952
    %1464 = vmatpush.bf16.msra.mxu0 %v948
    %1465 = vmatpush.bf16.msra.mxu0 %v944
    %1466 = vmatpush.bf16.msra.mxu0 %v940
    %1467 = vmatmul.bf16.gmra.mxu0 %v44
    %v1468 = vpop.f32.mrf.mxu0
    %v1469 = vadd.f32 %v1456, %v1468
    %v1470 = vpop.f32.mrf.mxu0
    %1471 = vdwg.mxu0
    %1472 = vmatpush.bf16.msra.mxu0 %v1000
    %1473 = vmatpush.bf16.msra.mxu0 %v996
    %1474 = vmatpush.bf16.msra.mxu0 %v992
    %1475 = vmatpush.bf16.msra.mxu0 %v988
    %1476 = vmatpush.bf16.msra.mxu0 %v984
    %1477 = vmatpush.bf16.msra.mxu0 %v980
    %1478 = vmatpush.bf16.msra.mxu0 %v976
    %1479 = vmatpush.bf16.msra.mxu0 %v972
    %1480 = vmatmul.bf16.gmra.mxu0 %v45
    %v1481 = vpop.f32.mrf.mxu0
    %v1482 = vadd.f32 %v1469, %v1481
    %v1483 = vpop.f32.mrf.mxu0
    %1484 = vdwg.mxu0
    %1485 = vmatpush.bf16.msra.mxu0 %v1032
    %1486 = vmatpush.bf16.msra.mxu0 %v1028
    %1487 = vmatpush.bf16.msra.mxu0 %v1024
    %1488 = vmatpush.bf16.msra.mxu0 %v1020
    %1489 = vmatpush.bf16.msra.mxu0 %v1016
    %1490 = vmatpush.bf16.msra.mxu0 %v1012
    %1491 = vmatpush.bf16.msra.mxu0 %v1008
    %1492 = vmatpush.bf16.msra.mxu0 %v1004
    %1493 = vmatmul.bf16.gmra.mxu0 %v46
    %v1494 = vpop.f32.mrf.mxu0
    %v1495 = vadd.f32 %v1482, %v1494
    %v1496 = vpop.f32.mrf.mxu0
    %1497 = vdwg.mxu0
    %1498 = vmatpush.bf16.msra.mxu0 0
    %1499 = vmatpush.bf16.msra.mxu0 0
    %1500 = vmatpush.bf16.msra.mxu0 0
    %1501 = vmatpush.bf16.msra.mxu0 0
    %1502 = vmatpush.bf16.msra.mxu0 0
    %1503 = vmatpush.bf16.msra.mxu0 0
    %1504 = vmatpush.bf16.msra.mxu0 0
    %1505 = vmatpush.bf16.msra.mxu0 %v1036
    %1506 = vmatmul.bf16.gmra.mxu0 %v1236
    %v1507 = vpop.f32.mrf.mxu0
    %v1508 = vadd.f32 %v1495, %v1507
    %v1509 = vpop.f32.mrf.mxu0
    %1510 = vdwg.mxu0
    %1511 = vmatpush.bf16.msra.mxu0 %v873
    %1512 = vmatpush.bf16.msra.mxu0 %v869
    %1513 = vmatpush.bf16.msra.mxu0 %v865
    %1514 = vmatpush.bf16.msra.mxu0 %v861
    %1515 = vmatpush.bf16.msra.mxu0 %v857
    %1516 = vmatpush.bf16.msra.mxu0 %v853
    %1517 = vmatpush.bf16.msra.mxu0 %v849
    %1518 = vmatpush.bf16.msra.mxu0 %v845
    %1519 = vmatmul.bf16.gmra.mxu0 %v41
    %v1520 = vpop.f32.mrf.mxu0
    %v1521 = vadd.f32 %v249, %v1520
    %v1522 = vpop.f32.mrf.mxu0
    %1523 = vdwg.mxu0
    %1524 = vmatpush.bf16.msra.mxu0 %v905
    %1525 = vmatpush.bf16.msra.mxu0 %v901
    %1526 = vmatpush.bf16.msra.mxu0 %v897
    %1527 = vmatpush.bf16.msra.mxu0 %v893
    %1528 = vmatpush.bf16.msra.mxu0 %v889
    %1529 = vmatpush.bf16.msra.mxu0 %v885
    %1530 = vmatpush.bf16.msra.mxu0 %v881
    %1531 = vmatpush.bf16.msra.mxu0 %v877
    %1532 = vmatmul.bf16.gmra.mxu0 %v42
    %v1533 = vpop.f32.mrf.mxu0
    %v1534 = vadd.f32 %v1521, %v1533
    %v1535 = vpop.f32.mrf.mxu0
    %1536 = vdwg.mxu0
    %1537 = vmatpush.bf16.msra.mxu0 %v937
    %1538 = vmatpush.bf16.msra.mxu0 %v933
    %1539 = vmatpush.bf16.msra.mxu0 %v929
    %1540 = vmatpush.bf16.msra.mxu0 %v925
    %1541 = vmatpush.bf16.msra.mxu0 %v921
    %1542 = vmatpush.bf16.msra.mxu0 %v917
    %1543 = vmatpush.bf16.msra.mxu0 %v913
    %1544 = vmatpush.bf16.msra.mxu0 %v909
    %1545 = vmatmul.bf16.gmra.mxu0 %v43
    %v1546 = vpop.f32.mrf.mxu0
    %v1547 = vadd.f32 %v1534, %v1546
    %v1548 = vpop.f32.mrf.mxu0
    %1549 = vdwg.mxu0
    %1550 = vmatpush.bf16.msra.mxu0 %v969
    %1551 = vmatpush.bf16.msra.mxu0 %v965
    %1552 = vmatpush.bf16.msra.mxu0 %v961
    %1553 = vmatpush.bf16.msra.mxu0 %v957
    %1554 = vmatpush.bf16.msra.mxu0 %v953
    %1555 = vmatpush.bf16.msra.mxu0 %v949
    %1556 = vmatpush.bf16.msra.mxu0 %v945
    %1557 = vmatpush.bf16.msra.mxu0 %v941
    %1558 = vmatmul.bf16.gmra.mxu0 %v44
    %v1559 = vpop.f32.mrf.mxu0
    %v1560 = vadd.f32 %v1547, %v1559
    %v1561 = vpop.f32.mrf.mxu0
    %1562 = vdwg.mxu0
    %1563 = vmatpush.bf16.msra.mxu0 %v1001
    %1564 = vmatpush.bf16.msra.mxu0 %v997
    %1565 = vmatpush.bf16.msra.mxu0 %v993
    %1566 = vmatpush.bf16.msra.mxu0 %v989
    %1567 = vmatpush.bf16.msra.mxu0 %v985
    %1568 = vmatpush.bf16.msra.mxu0 %v981
    %1569 = vmatpush.bf16.msra.mxu0 %v977
    %1570 = vmatpush.bf16.msra.mxu0 %v973
    %1571 = vmatmul.bf16.gmra.mxu0 %v45
    %v1572 = vpop.f32.mrf.mxu0
    %v1573 = vadd.f32 %v1560, %v1572
    %v1574 = vpop.f32.mrf.mxu0
    %1575 = vdwg.mxu0
    %1576 = vmatpush.bf16.msra.mxu0 %v1033
    %1577 = vmatpush.bf16.msra.mxu0 %v1029
    %1578 = vmatpush.bf16.msra.mxu0 %v1025
    %1579 = vmatpush.bf16.msra.mxu0 %v1021
    %1580 = vmatpush.bf16.msra.mxu0 %v1017
    %1581 = vmatpush.bf16.msra.mxu0 %v1013
    %1582 = vmatpush.bf16.msra.mxu0 %v1009
    %1583 = vmatpush.bf16.msra.mxu0 %v1005
    %1584 = vmatmul.bf16.gmra.mxu0 %v46
    %v1585 = vpop.f32.mrf.mxu0
    %v1586 = vadd.f32 %v1573, %v1585
    %v1587 = vpop.f32.mrf.mxu0
    %1588 = vdwg.mxu0
    %1589 = vmatpush.bf16.msra.mxu0 0
    %1590 = vmatpush.bf16.msra.mxu0 0
    %1591 = vmatpush.bf16.msra.mxu0 0
    %1592 = vmatpush.bf16.msra.mxu0 0
    %1593 = vmatpush.bf16.msra.mxu0 0
    %1594 = vmatpush.bf16.msra.mxu0 0
    %1595 = vmatpush.bf16.msra.mxu0 0
    %1596 = vmatpush.bf16.msra.mxu0 %v1037
    %1597 = vmatmul.bf16.gmra.mxu0 %v1236
    %v1598 = vpop.f32.mrf.mxu0
    %v1599 = vadd.f32 %v1586, %v1598
    %v1600 = vpop.f32.mrf.mxu0
    %1601 = vdwg.mxu0
    %v1602 = vmax.f32 %v1326, 0.0
    %v1603 = vmax.f32 %v1417, 0.0
    %v1604 = vmax.f32 %v1508, 0.0
    %v1605 = vmax.f32 %v1599, 0.0
    %v1606 = vpack.c.bf16 %v1602, %v1602
    %v1607 = vpack.c.bf16 %v1603, %v1603
    %v1608 = vpack.c.bf16 %v1604, %v1604
    %v1609 = vpack.c.bf16 %v1605, %v1605
    %v1610 = vld [vmem:[%s3] sm:$0xff]
    %v1611 = vld [vmem:[%s3 + $0x8] sm:$0xff]
    %v1612 = vld [vmem:[%s3 + $0x10] sm:$0xff]
    %v1613 = vld [vmem:[%s3 + $0x18] sm:$0xff]
    %v1614 = vld [vmem:[%s3 + $0x20] sm:$0xff]
    %v1615 = vld [vmem:[%s3 + $0x28] sm:$0xff]
    %v1616 = vld [vmem:[%s3 + $0x30] sm:$0xff]
    %v1617 = vld [vmem:[%s3 + $0x38] sm:$0xff]
    %v1618 = vld [vmem:[%s3 + $0x40] sm:$0xff]
    %v1619 = vld [vmem:[%s3 + $0x48] sm:$0xff]
    %v1620 = vld [vmem:[%s3 + $0x50] sm:$0xff]
    %v1621 = vld [vmem:[%s3 + $0x58] sm:$0xff]
    %v1622 = vld [vmem:[%s3 + $0x60] sm:$0xff]
    %v1623 = vld [vmem:[%s3 + $0x68] sm:$0xff]
    %v1624 = vld [vmem:[%s3 + $0x70] sm:$0xff]
    %v1625 = vld [vmem:[%s3 + $0x78] sm:$0xff]
    %v1626 = vld [vmem:[%s3 + $0x80] sm:$0xff]
    %v1627 = vld [vmem:[%s3 + $0x88] sm:$0xff]
    %v1628 = vld [vmem:[%s3 + $0x90] sm:$0xff]
    %v1629 = vld [vmem:[%s3 + $0x98] sm:$0xff]
    %v1630 = vld [vmem:[%s3 + $0xa0] sm:$0xff]
    %v1631 = vld [vmem:[%s3 + $0xa8] sm:$0xff]
    %v1632 = vld [vmem:[%s3 + $0xb0] sm:$0xff]
    %v1633 = vld [vmem:[%s3 + $0xb8] sm:$0xff]
    %v1634 = vld [vmem:[%s3 + $0xc0] sm:$0xff]
    %v1635 = vld [vmem:[%s3 + $0xc8] sm:$0xff]
    %v1636 = vld [vmem:[%s3 + $0xd0] sm:$0xff]
    %v1637 = vld [vmem:[%s3 + $0xd8] sm:$0xff]
    %v1638 = vld [vmem:[%s3 + $0xe0] sm:$0xff]
    %v1639 = vld [vmem:[%s3 + $0xe8] sm:$0xff]
    %v1640 = vld [vmem:[%s3 + $0xf0] sm:$0xff]
    %v1641 = vld [vmem:[%s3 + $0xf8] sm:$0xff]
    %v1642 = vld [vmem:[%s3 + $0x100] sm:$0xff]
    %v1643 = vld [vmem:[%s3 + $0x108] sm:$0xff]
    %v1644 = vld [vmem:[%s3 + $0x110] sm:$0xff]
    %v1645 = vld [vmem:[%s3 + $0x118] sm:$0xff]
    %v1646 = vld [vmem:[%s3 + $0x120] sm:$0xff]
    %v1647 = vld [vmem:[%s3 + $0x128] sm:$0xff]
    %v1648 = vld [vmem:[%s3 + $0x130] sm:$0xff]
    %v1649 = vld [vmem:[%s3 + $0x138] sm:$0xff]
    %v1650 = vld [vmem:[%s3 + $0x140] sm:$0xff]
    %v1651 = vld [vmem:[%s3 + $0x148] sm:$0xff]
    %v1652 = vld [vmem:[%s3 + $0x150] sm:$0xff]
    %v1653 = vld [vmem:[%s3 + $0x158] sm:$0xff]
    %v1654 = vld [vmem:[%s3 + $0x160] sm:$0xff]
    %v1655 = vld [vmem:[%s3 + $0x168] sm:$0xff]
    %v1656 = vld [vmem:[%s3 + $0x170] sm:$0xff]
    %v1657 = vld [vmem:[%s3 + $0x178] sm:$0xff]
    %v1658 = vld [vmem:[%s3 + $0x180] sm:$0xff]
    %v1659 = vld [vmem:[%s3 + $0x188] sm:$0xff]
    %v1660 = vld [vmem:[%s4] sm:$0x3]
    %v1662 = vperm.slane %v1660, 0
    %v1663 = vperm.slane %v1660, 1
    %v1716 = vunpack.c.l.b16 %v1610
    %v1717 = vunpack.c.h.b16 %v1610
    %v1718 = vunpack.c.l.b16 %v1611
    %v1719 = vunpack.c.h.b16 %v1611
    %v1720 = vunpack.c.l.b16 %v1612
    %v1721 = vunpack.c.h.b16 %v1612
    %v1722 = vunpack.c.l.b16 %v1613
    %v1723 = vunpack.c.h.b16 %v1613
    %v1724 = vunpack.c.l.b16 %v1614
    %v1725 = vunpack.c.h.b16 %v1614
    %v1726 = vunpack.c.l.b16 %v1615
    %v1727 = vunpack.c.h.b16 %v1615
    %v1728 = vunpack.c.l.b16 %v1616
    %v1729 = vunpack.c.h.b16 %v1616
    %v1730 = vunpack.c.l.b16 %v1617
    %v1731 = vunpack.c.h.b16 %v1617
    %v1732 = vunpack.c.l.b16 %v1618
    %v1733 = vunpack.c.h.b16 %v1618
    %v1734 = vunpack.c.l.b16 %v1619
    %v1735 = vunpack.c.h.b16 %v1619
    %v1736 = vunpack.c.l.b16 %v1620
    %v1737 = vunpack.c.h.b16 %v1620
    %v1738 = vunpack.c.l.b16 %v1621
    %v1739 = vunpack.c.h.b16 %v1621
    %v1740 = vunpack.c.l.b16 %v1622
    %v1741 = vunpack.c.h.b16 %v1622
    %v1742 = vunpack.c.l.b16 %v1623
    %v1743 = vunpack.c.h.b16 %v1623
    %v1744 = vunpack.c.l.b16 %v1624
    %v1745 = vunpack.c.h.b16 %v1624
    %v1746 = vunpack.c.l.b16 %v1625
    %v1747 = vunpack.c.h.b16 %v1625
    %v1748 = vunpack.c.l.b16 %v1626
    %v1749 = vunpack.c.h.b16 %v1626
    %v1750 = vunpack.c.l.b16 %v1627
    %v1751 = vunpack.c.h.b16 %v1627
    %v1752 = vunpack.c.l.b16 %v1628
    %v1753 = vunpack.c.h.b16 %v1628
    %v1754 = vunpack.c.l.b16 %v1629
    %v1755 = vunpack.c.h.b16 %v1629
    %v1756 = vunpack.c.l.b16 %v1630
    %v1757 = vunpack.c.h.b16 %v1630
    %v1758 = vunpack.c.l.b16 %v1631
    %v1759 = vunpack.c.h.b16 %v1631
    %v1760 = vunpack.c.l.b16 %v1632
    %v1761 = vunpack.c.h.b16 %v1632
    %v1762 = vunpack.c.l.b16 %v1633
    %v1763 = vunpack.c.h.b16 %v1633
    %v1764 = vunpack.c.l.b16 %v1634
    %v1765 = vunpack.c.h.b16 %v1634
    %v1766 = vunpack.c.l.b16 %v1635
    %v1767 = vunpack.c.h.b16 %v1635
    %v1768 = vunpack.c.l.b16 %v1636
    %v1769 = vunpack.c.h.b16 %v1636
    %v1770 = vunpack.c.l.b16 %v1637
    %v1771 = vunpack.c.h.b16 %v1637
    %v1772 = vunpack.c.l.b16 %v1638
    %v1773 = vunpack.c.h.b16 %v1638
    %v1774 = vunpack.c.l.b16 %v1639
    %v1775 = vunpack.c.h.b16 %v1639
    %v1776 = vunpack.c.l.b16 %v1640
    %v1777 = vunpack.c.h.b16 %v1640
    %v1778 = vunpack.c.l.b16 %v1641
    %v1779 = vunpack.c.h.b16 %v1641
    %v1780 = vunpack.c.l.b16 %v1642
    %v1781 = vunpack.c.h.b16 %v1642
    %v1782 = vunpack.c.l.b16 %v1643
    %v1783 = vunpack.c.h.b16 %v1643
    %v1784 = vunpack.c.l.b16 %v1644
    %v1785 = vunpack.c.h.b16 %v1644
    %v1786 = vunpack.c.l.b16 %v1645
    %v1787 = vunpack.c.h.b16 %v1645
    %v1788 = vunpack.c.l.b16 %v1646
    %v1789 = vunpack.c.h.b16 %v1646
    %v1790 = vunpack.c.l.b16 %v1647
    %v1791 = vunpack.c.h.b16 %v1647
    %v1792 = vunpack.c.l.b16 %v1648
    %v1793 = vunpack.c.h.b16 %v1648
    %v1794 = vunpack.c.l.b16 %v1649
    %v1795 = vunpack.c.h.b16 %v1649
    %v1796 = vunpack.c.l.b16 %v1650
    %v1797 = vunpack.c.h.b16 %v1650
    %v1798 = vunpack.c.l.b16 %v1651
    %v1799 = vunpack.c.h.b16 %v1651
    %v1800 = vunpack.c.l.b16 %v1652
    %v1801 = vunpack.c.h.b16 %v1652
    %v1802 = vunpack.c.l.b16 %v1653
    %v1803 = vunpack.c.h.b16 %v1653
    %v1804 = vunpack.c.l.b16 %v1654
    %v1805 = vunpack.c.h.b16 %v1654
    %v1806 = vunpack.c.l.b16 %v1655
    %v1807 = vunpack.c.h.b16 %v1655
    %v1808 = vunpack.c.l.b16 %v1656
    %v1809 = vunpack.c.h.b16 %v1656
    %v1810 = vunpack.c.l.b16 %v1657
    %v1811 = vunpack.c.h.b16 %v1657
    %v1812 = vunpack.c.l.b16 %v1658
    %v1813 = vunpack.c.h.b16 %v1658
    %v1814 = vunpack.c.l.b16 %v1659
    %v1815 = vunpack.c.h.b16 %v1659
    %v1816 = vpack.c.b16 %v1718, %v1716
    %v1817 = vpack.c.b16 %v1719, %v1717
    %v1818 = vpack.c.b16 %v1722, %v1720
    %v1819 = vpack.c.b16 %v1723, %v1721
    %v1820 = vpack.c.b16 %v1726, %v1724
    %v1821 = vpack.c.b16 %v1727, %v1725
    %v1822 = vpack.c.b16 %v1730, %v1728
    %v1823 = vpack.c.b16 %v1731, %v1729
    %v1824 = vpack.c.b16 %v1734, %v1732
    %v1825 = vpack.c.b16 %v1735, %v1733
    %v1826 = vpack.c.b16 %v1738, %v1736
    %v1827 = vpack.c.b16 %v1739, %v1737
    %v1828 = vpack.c.b16 %v1742, %v1740
    %v1829 = vpack.c.b16 %v1743, %v1741
    %v1830 = vpack.c.b16 %v1746, %v1744
    %v1831 = vpack.c.b16 %v1747, %v1745
    %v1832 = vpack.c.b16 %v1750, %v1748
    %v1833 = vpack.c.b16 %v1751, %v1749
    %v1834 = vpack.c.b16 %v1754, %v1752
    %v1835 = vpack.c.b16 %v1755, %v1753
    %v1836 = vpack.c.b16 %v1758, %v1756
    %v1837 = vpack.c.b16 %v1759, %v1757
    %v1838 = vpack.c.b16 %v1762, %v1760
    %v1839 = vpack.c.b16 %v1763, %v1761
    %v1840 = vpack.c.b16 %v1766, %v1764
    %v1841 = vpack.c.b16 %v1767, %v1765
    %v1842 = vpack.c.b16 %v1770, %v1768
    %v1843 = vpack.c.b16 %v1771, %v1769
    %v1844 = vpack.c.b16 %v1774, %v1772
    %v1845 = vpack.c.b16 %v1775, %v1773
    %v1846 = vpack.c.b16 %v1778, %v1776
    %v1847 = vpack.c.b16 %v1779, %v1777
    %v1848 = vpack.c.b16 %v1782, %v1780
    %v1849 = vpack.c.b16 %v1783, %v1781
    %v1850 = vpack.c.b16 %v1786, %v1784
    %v1851 = vpack.c.b16 %v1787, %v1785
    %v1852 = vpack.c.b16 %v1790, %v1788
    %v1853 = vpack.c.b16 %v1791, %v1789
    %v1854 = vpack.c.b16 %v1794, %v1792
    %v1855 = vpack.c.b16 %v1795, %v1793
    %v1856 = vpack.c.b16 %v1798, %v1796
    %v1857 = vpack.c.b16 %v1799, %v1797
    %v1858 = vpack.c.b16 %v1802, %v1800
    %v1859 = vpack.c.b16 %v1803, %v1801
    %v1860 = vpack.c.b16 %v1806, %v1804
    %v1861 = vpack.c.b16 %v1807, %v1805
    %v1862 = vpack.c.b16 %v1810, %v1808
    %v1863 = vpack.c.b16 %v1811, %v1809
    %v1864 = vpack.c.b16 %v1814, %v1812
    %v1865 = vpack.c.b16 %v1815, %v1813
    %v1917 = vsel %vm1234, %v1609, 0
    %1919 = vmatpush.bf16.msra.mxu0 %v1830
    %1920 = vmatpush.bf16.msra.mxu0 %v1828
    %1921 = vmatpush.bf16.msra.mxu0 %v1826
    %1922 = vmatpush.bf16.msra.mxu0 %v1824
    %1923 = vmatpush.bf16.msra.mxu0 %v1822
    %1924 = vmatpush.bf16.msra.mxu0 %v1820
    %1925 = vmatpush.bf16.msra.mxu0 %v1818
    %1926 = vmatpush.bf16.msra.mxu0 %v1816
    %1927 = vmatmul.bf16.gmra.mxu0 %v1606
    %v1928 = vpop.f32.mrf.mxu0
    %v1929 = vadd.f32 %v1662, %v1928
    %v1930 = vpop.f32.mrf.mxu0
    %1931 = vdwg.mxu0
    %1932 = vmatpush.bf16.msra.mxu0 %v1846
    %1933 = vmatpush.bf16.msra.mxu0 %v1844
    %1934 = vmatpush.bf16.msra.mxu0 %v1842
    %1935 = vmatpush.bf16.msra.mxu0 %v1840
    %1936 = vmatpush.bf16.msra.mxu0 %v1838
    %1937 = vmatpush.bf16.msra.mxu0 %v1836
    %1938 = vmatpush.bf16.msra.mxu0 %v1834
    %1939 = vmatpush.bf16.msra.mxu0 %v1832
    %1940 = vmatmul.bf16.gmra.mxu0 %v1607
    %v1941 = vpop.f32.mrf.mxu0
    %v1942 = vadd.f32 %v1929, %v1941
    %v1943 = vpop.f32.mrf.mxu0
    %1944 = vdwg.mxu0
    %1945 = vmatpush.bf16.msra.mxu0 %v1862
    %1946 = vmatpush.bf16.msra.mxu0 %v1860
    %1947 = vmatpush.bf16.msra.mxu0 %v1858
    %1948 = vmatpush.bf16.msra.mxu0 %v1856
    %1949 = vmatpush.bf16.msra.mxu0 %v1854
    %1950 = vmatpush.bf16.msra.mxu0 %v1852
    %1951 = vmatpush.bf16.msra.mxu0 %v1850
    %1952 = vmatpush.bf16.msra.mxu0 %v1848
    %1953 = vmatmul.bf16.gmra.mxu0 %v1608
    %v1954 = vpop.f32.mrf.mxu0
    %v1955 = vadd.f32 %v1942, %v1954
    %v1956 = vpop.f32.mrf.mxu0
    %1957 = vdwg.mxu0
    %1958 = vmatpush.bf16.msra.mxu0 0
    %1959 = vmatpush.bf16.msra.mxu0 0
    %1960 = vmatpush.bf16.msra.mxu0 0
    %1961 = vmatpush.bf16.msra.mxu0 0
    %1962 = vmatpush.bf16.msra.mxu0 0
    %1963 = vmatpush.bf16.msra.mxu0 0
    %1964 = vmatpush.bf16.msra.mxu0 0
    %1965 = vmatpush.bf16.msra.mxu0 %v1864
    %1966 = vmatmul.bf16.gmra.mxu0 %v1917
    %v1967 = vpop.f32.mrf.mxu0
    %v1968 = vadd.f32 %v1955, %v1967
    %v1969 = vpop.f32.mrf.mxu0
    %1970 = vdwg.mxu0
    %1971 = vmatpush.bf16.msra.mxu0 %v1831
    %1972 = vmatpush.bf16.msra.mxu0 %v1829
    %1973 = vmatpush.bf16.msra.mxu0 %v1827
    %1974 = vmatpush.bf16.msra.mxu0 %v1825
    %1975 = vmatpush.bf16.msra.mxu0 %v1823
    %1976 = vmatpush.bf16.msra.mxu0 %v1821
    %1977 = vmatpush.bf16.msra.mxu0 %v1819
    %1978 = vmatpush.bf16.msra.mxu0 %v1817
    %1979 = vmatmul.bf16.gmra.mxu0 %v1606
    %v1980 = vpop.f32.mrf.mxu0
    %v1981 = vadd.f32 %v1663, %v1980
    %v1982 = vpop.f32.mrf.mxu0
    %1983 = vdwg.mxu0
    %1984 = vmatpush.bf16.msra.mxu0 %v1847
    %1985 = vmatpush.bf16.msra.mxu0 %v1845
    %1986 = vmatpush.bf16.msra.mxu0 %v1843
    %1987 = vmatpush.bf16.msra.mxu0 %v1841
    %1988 = vmatpush.bf16.msra.mxu0 %v1839
    %1989 = vmatpush.bf16.msra.mxu0 %v1837
    %1990 = vmatpush.bf16.msra.mxu0 %v1835
    %1991 = vmatpush.bf16.msra.mxu0 %v1833
    %1992 = vmatmul.bf16.gmra.mxu0 %v1607
    %v1993 = vpop.f32.mrf.mxu0
    %v1994 = vadd.f32 %v1981, %v1993
    %v1995 = vpop.f32.mrf.mxu0
    %1996 = vdwg.mxu0
    %1997 = vmatpush.bf16.msra.mxu0 %v1863
    %1998 = vmatpush.bf16.msra.mxu0 %v1861
    %1999 = vmatpush.bf16.msra.mxu0 %v1859
    %2000 = vmatpush.bf16.msra.mxu0 %v1857
    %2001 = vmatpush.bf16.msra.mxu0 %v1855
    %2002 = vmatpush.bf16.msra.mxu0 %v1853
    %2003 = vmatpush.bf16.msra.mxu0 %v1851
    %2004 = vmatpush.bf16.msra.mxu0 %v1849
    %2005 = vmatmul.bf16.gmra.mxu0 %v1608
    %v2006 = vpop.f32.mrf.mxu0
    %v2007 = vadd.f32 %v1994, %v2006
    %v2008 = vpop.f32.mrf.mxu0
    %2009 = vdwg.mxu0
    %2010 = vmatpush.bf16.msra.mxu0 0
    %2011 = vmatpush.bf16.msra.mxu0 0
    %2012 = vmatpush.bf16.msra.mxu0 0
    %2013 = vmatpush.bf16.msra.mxu0 0
    %2014 = vmatpush.bf16.msra.mxu0 0
    %2015 = vmatpush.bf16.msra.mxu0 0
    %2016 = vmatpush.bf16.msra.mxu0 0
    %2017 = vmatpush.bf16.msra.mxu0 %v1865
    %2018 = vmatmul.bf16.gmra.mxu0 %v1917
    %v2019 = vpop.f32.mrf.mxu0
    %v2020 = vadd.f32 %v2007, %v2019
    %v2021 = vpop.f32.mrf.mxu0
    %2022 = vdwg.mxu0
    %v2023 = vmax.f32 %v1968, 0.0
    %v2024 = vmax.f32 %v2020, 0.0
    %v2025 = vpack.c.bf16 %v2023, %v2023
    %v2026 = vpack.c.bf16 %v2024, %v2024
    %v2027 = vld [vmem:[%s5] sm:$0xf]
    %v2028 = vld [vmem:[%s5 + $0x4] sm:$0xf]
    %v2029 = vld [vmem:[%s5 + $0x8] sm:$0xf]
    %v2030 = vld [vmem:[%s5 + $0xc] sm:$0xf]
    %v2031 = vld [vmem:[%s5 + $0x10] sm:$0xf]
    %v2032 = vld [vmem:[%s5 + $0x14] sm:$0xf]
    %v2033 = vld [vmem:[%s5 + $0x18] sm:$0xf]
    %v2034 = vld [vmem:[%s5 + $0x1c] sm:$0xf]
    %v2035 = vld [vmem:[%s5 + $0x20] sm:$0xf]
    %v2036 = vld [vmem:[%s5 + $0x24] sm:$0xf]
    %v2037 = vld [vmem:[%s5 + $0x28] sm:$0xf]
    %v2038 = vld [vmem:[%s5 + $0x2c] sm:$0xf]
    %v2039 = vld [vmem:[%s5 + $0x30] sm:$0xf]
    %v2040 = vld [vmem:[%s5 + $0x34] sm:$0xf]
    %v2041 = vld [vmem:[%s5 + $0x38] sm:$0xf]
    %v2042 = vld [vmem:[%s5 + $0x3c] sm:$0xf]
    %v2043 = vld [vmem:[%s5 + $0x40] sm:$0xf]
    %v2044 = vld [vmem:[%s5 + $0x44] sm:$0xf]
    %v2045 = vld [vmem:[%s5 + $0x48] sm:$0xf]
    %v2046 = vld [vmem:[%s5 + $0x4c] sm:$0xf]
    %v2047 = vld [vmem:[%s5 + $0x50] sm:$0xf]
    %v2048 = vld [vmem:[%s5 + $0x54] sm:$0xf]
    %v2049 = vld [vmem:[%s5 + $0x58] sm:$0xf]
    %v2050 = vld [vmem:[%s5 + $0x5c] sm:$0xf]
    %v2051 = vld [vmem:[%s5 + $0x60] sm:$0xf]
    %v2052 = vld [vmem:[%s6] sm:$0x1]
    %v2054 = vperm.slane %v2052, 0
    %v2081 = vunpack.c.l.b16 %v2027
    %v2082 = vunpack.c.l.b16 %v2028
    %v2083 = vunpack.c.l.b16 %v2029
    %v2084 = vunpack.c.l.b16 %v2030
    %v2085 = vunpack.c.l.b16 %v2031
    %v2086 = vunpack.c.l.b16 %v2032
    %v2087 = vunpack.c.l.b16 %v2033
    %v2088 = vunpack.c.l.b16 %v2034
    %v2089 = vunpack.c.l.b16 %v2035
    %v2090 = vunpack.c.l.b16 %v2036
    %v2091 = vunpack.c.l.b16 %v2037
    %v2092 = vunpack.c.l.b16 %v2038
    %v2093 = vunpack.c.l.b16 %v2039
    %v2094 = vunpack.c.l.b16 %v2040
    %v2095 = vunpack.c.l.b16 %v2041
    %v2096 = vunpack.c.l.b16 %v2042
    %v2097 = vunpack.c.l.b16 %v2043
    %v2098 = vunpack.c.l.b16 %v2044
    %v2099 = vunpack.c.l.b16 %v2045
    %v2100 = vunpack.c.l.b16 %v2046
    %v2101 = vunpack.c.l.b16 %v2047
    %v2102 = vunpack.c.l.b16 %v2048
    %v2103 = vunpack.c.l.b16 %v2049
    %v2104 = vunpack.c.l.b16 %v2050
    %v2105 = vunpack.c.l.b16 %v2051
    %v2106 = vpack.c.b16 %v2082, %v2081
    %v2107 = vpack.c.b16 %v2084, %v2083
    %v2108 = vpack.c.b16 %v2086, %v2085
    %v2109 = vpack.c.b16 %v2088, %v2087
    %v2110 = vpack.c.b16 %v2090, %v2089
    %v2111 = vpack.c.b16 %v2092, %v2091
    %v2112 = vpack.c.b16 %v2094, %v2093
    %v2113 = vpack.c.b16 %v2096, %v2095
    %v2114 = vpack.c.b16 %v2098, %v2097
    %v2115 = vpack.c.b16 %v2100, %v2099
    %v2116 = vpack.c.b16 %v2102, %v2101
    %v2117 = vpack.c.b16 %v2104, %v2103
    %v2118 = vpack.c.b16 %v2105, %v2105
    %vm2131 = vcmask 588800
    %v2133 = vsel %vm2131, %v2026, 0
    %vm2135 = vcmask 1043456
    %v2137 = vsel %vm2135, %v2118, 0
    %2139 = vmatpush.bf16.msra.mxu0 %v2113
    %2140 = vmatpush.bf16.msra.mxu0 %v2112
    %2141 = vmatpush.bf16.msra.mxu0 %v2111
    %2142 = vmatpush.bf16.msra.mxu0 %v2110
    %2143 = vmatpush.bf16.msra.mxu0 %v2109
    %2144 = vmatpush.bf16.msra.mxu0 %v2108
    %2145 = vmatpush.bf16.msra.mxu0 %v2107
    %2146 = vmatpush.bf16.msra.mxu0 %v2106
    %2147 = vmatmul.bf16.gmra.mxu0 %v2025
    %v2148 = vpop.f32.mrf.mxu0
    %v2149 = vadd.f32 %v2054, %v2148
    %v2150 = vpop.f32.mrf.mxu0
    %2151 = vdwg.mxu0
    %2152 = vmatpush.bf16.msra.mxu0 0
    %2153 = vmatpush.bf16.msra.mxu0 0
    %2154 = vmatpush.bf16.msra.mxu0 0
    %2155 = vmatpush.bf16.msra.mxu0 %v2137
    %2156 = vmatpush.bf16.msra.mxu0 %v2117
    %2157 = vmatpush.bf16.msra.mxu0 %v2116
    %2158 = vmatpush.bf16.msra.mxu0 %v2115
    %2159 = vmatpush.bf16.msra.mxu0 %v2114
    %2160 = vmatmul.bf16.gmra.mxu0 %v2133
    %v2161 = vpop.f32.mrf.mxu0
    %v2162 = vadd.f32 %v2149, %v2161
    %v2163 = vpop.f32.mrf.mxu0
    %2164 = vdwg.mxu0
    %v2165 = vmax.f32 %v2162, 0.0
    %v2166 = vpack.c.bf16 %v2165, %v2165
    %v2167 = vld [vmem:[%s7] sm:$0xf]
    %v2168 = vld [vmem:[%s7 + $0x4] sm:$0xf]
    %v2169 = vld [vmem:[%s7 + $0x8] sm:$0xf]
    %v2170 = vld [vmem:[%s7 + $0xc] sm:$0xf]
    %v2171 = vld [vmem:[%s7 + $0x10] sm:$0xf]
    %v2172 = vld [vmem:[%s7 + $0x14] sm:$0xf]
    %v2173 = vld [vmem:[%s7 + $0x18] sm:$0xf]
    %v2174 = vld [vmem:[%s7 + $0x1c] sm:$0xf]
    %v2175 = vld [vmem:[%s7 + $0x20] sm:$0xf]
    %v2176 = vld [vmem:[%s7 + $0x24] sm:$0xf]
    %v2177 = vld [vmem:[%s7 + $0x28] sm:$0xf]
    %v2178 = vld [vmem:[%s7 + $0x2c] sm:$0xf]
    %v2179 = vld [vmem:[%s7 + $0x30] sm:$0x3]
    %v2180 = vld [vmem:[%s8] sm:$0x1]
    %v2182 = vperm.slane %v2180, 0
    %v2197 = vunpack.c.l.b16 %v2167
    %v2198 = vunpack.c.l.b16 %v2168
    %v2199 = vunpack.c.l.b16 %v2169
    %v2200 = vunpack.c.l.b16 %v2170
    %v2201 = vunpack.c.l.b16 %v2171
    %v2202 = vunpack.c.l.b16 %v2172
    %v2203 = vunpack.c.l.b16 %v2173
    %v2204 = vunpack.c.l.b16 %v2174
    %v2205 = vunpack.c.l.b16 %v2175
    %v2206 = vunpack.c.l.b16 %v2176
    %v2207 = vunpack.c.l.b16 %v2177
    %v2208 = vunpack.c.l.b16 %v2178
    %v2209 = vunpack.c.l.b16 %v2179
    %v2210 = vpack.c.b16 %v2198, %v2197
    %v2211 = vpack.c.b16 %v2200, %v2199
    %v2212 = vpack.c.b16 %v2202, %v2201
    %v2213 = vpack.c.b16 %v2204, %v2203
    %v2214 = vpack.c.b16 %v2206, %v2205
    %v2215 = vpack.c.b16 %v2208, %v2207
    %v2216 = vpack.c.b16 %v2209, %v2209
    %vm2223 = vcmask 818176
    %v2225 = vsel %vm2223, %v2166, 0
    %vm2227 = vcmask 1041408
    %v2229 = vsel %vm2227, %v2216, 0
    %2231 = vmatpush.bf16.msra.mxu0 0
    %2232 = vmatpush.bf16.msra.mxu0 %v2229
    %2233 = vmatpush.bf16.msra.mxu0 %v2215
    %2234 = vmatpush.bf16.msra.mxu0 %v2214
    %2235 = vmatpush.bf16.msra.mxu0 %v2213
    %2236 = vmatpush.bf16.msra.mxu0 %v2212
    %2237 = vmatpush.bf16.msra.mxu0 %v2211
    %2238 = vmatpush.bf16.msra.mxu0 %v2210
    %2239 = vmatmul.bf16.gmra.mxu0 %v2225
    %v2240 = vpop.f32.mrf.mxu0
    %v2241 = vadd.f32 %v2182, %v2240
    %v2242 = vpop.f32.mrf.mxu0
    %2243 = vdwg.mxu0
    %vm2244 = vcmask 80896
    %v2245 = vsel %vm2244, %v2241, -inf
    %2246 = vmax.xlane.f32.xlu0 %v2245
    %v2247 = vpop.xlane.xlu0 %2246
    %v2248 = vsub.f32 %v2241, %v2247
    %v2249 = vmul.f32 %v2248, 1.442695
    %v2250 = vpow.pop %v2249
    %v2251 = vsel %vm2244, %v2250, 0.0
    %2252 = vadd.xlane.f32.xlu0 %v2251
    %v2253 = vpop.xlane.xlu0 %2252
    %v2254 = vlog2.pop %v2253
    %v2255 = vmul.f32 %v2254, 0.6931472
    %v2256 = vsub.f32 %v2248, %v2255
    %2257 = vst.msk [vmem:[#allocation2] sm:$0xff] %vm2244, %v2256
    // Predicated region
    $region38: #{tpu_custom_call.1} parent=1 // pred_check
      _
    $region39: #{tpu_custom_call.1} parent=1 // pred_check_branch
      %2259 = sbr.rel (0) target = $region41
    $region40: #{tpu_custom_call.1} parent=1 // pred_region
      %2261 = vsyncadd [#allocation3], 0
      %s2263 = sshll.u32 [#allocation2], 4
      %s2264 = int_to_ptr.vmem [resolvable:$true] %s2263
      %s2265 = sshll.u32 %s9, 4
      %s2266 = int_to_ptr.hbm [resolvable:$true] %s2265
      %2268 = dma.vmem_to_hbm [thread:$0]  %s2264, 128, %s2266, [#allocation3]
    $region41: #{tpu_custom_call.1} parent=1 // pred_fallthru
      _
    // Predicated region
    $region42: #{tpu_custom_call.1} parent=1 // pred_check
      _
    $region43: #{tpu_custom_call.1} parent=1 // pred_check_branch
      %2270 = sbr.rel (0) target = $region45
    $region44: #{tpu_custom_call.1} parent=1 // pred_region
      %2272 = dma.done [#allocation3], 128
    $region45: #{tpu_custom_call.1} parent=1 // pred_fallthru
      _
    %2273 = vsyncpa [#allocation3], 1

</llo_original>
